<compile_context>
chip_gen: v5e
topology: v5e:2x2
jax: 0.10.0
libtpu: 0.0.40
codegen_flags: <defaults>
</compile_context>

<pallas_src>
import jax
import jax.numpy as jnp
from jax.experimental import pallas as pl
from jax.experimental.pallas import tpu as pltpu

FEAT_DIM = 512                     # r2plus1d_18 feat_dim
LN_EPS = 1e-5                      # torch.nn.LayerNorm default eps
HEAD_PAD = 128                     # lane-dense padded width for the two heads (4 + 8 -> 128)
TK_MAX = 4096                      # max K tile (a (4096, 256) bf16 w block = 2 MiB)
X_RESIDENT_MAX_BYTES = 4 * 1024 * 1024   # keep x fully resident in VMEM below this


def _round_up(x, m):
    return (x + m - 1) // m * m


def _pick_tk(k_pad, tk_max=TK_MAX):
    """Largest multiple of 512 that divides k_pad and is <= tk_max."""
    best = 512
    t = 512
    while t <= min(k_pad, tk_max):
        if k_pad % t == 0:
            best = t
        t += 512
    return best


# ---------------------------------------------------------------------------
# Kernel 1: K-tiled feature matmul (N-split across TensorCores) + view-max
# ---------------------------------------------------------------------------
def _make_feat_kernel(x_resident, tk, nk):
    def kernel(x_ref, w_ref, bfeat_ref, feats_ref, pooled_ref):
        k = pl.program_id(1)

        @pl.when(k == 0)
        def _():
            feats_ref[...] = jnp.zeros_like(feats_ref)

        if x_resident and nk > 1:
            start = pl.multiple_of(k * tk, tk)
            x_blk = x_ref[:, pl.ds(start, tk)]
        else:
            x_blk = x_ref[...]

        # bf16 x / w on the MXU, f32 accumulation directly into the resident
        # feats output block (no separate accumulator scratch).
        feats_ref[...] += jnp.dot(x_blk, w_ref[...],
                                  preferred_element_type=jnp.float32)

        @pl.when(k == nk - 1)
        def _():
            feats = feats_ref[...] + bfeat_ref[...]     # add bias once, at the end
            feats_ref[...] = feats                      # aux / attention output
            # ViewMaxAggregate: max over views via aligned static sublane slices
            # (rows are view-major, batch padded to a sublane multiple).
            b_pad = pooled_ref.shape[0]
            n_views = feats.shape[0] // b_pad
            pooled = feats[0:b_pad, :]
            for v in range(1, n_views):
                pooled = jnp.maximum(pooled, feats[v * b_pad:(v + 1) * b_pad, :])
            pooled_ref[...] = pooled

    return kernel


def _feat_call(x, prep, b_pad):
    mp, k_pad = x.shape
    d = FEAT_DIM
    tk = prep["tk"]
    nk = k_pad // tk
    ns = prep["n_split"]
    dn = d // ns

    w = prep["w_feat"]
    b_feat = prep["b_feat"]

    x_resident = (x.size * x.dtype.itemsize) <= X_RESIDENT_MAX_BYTES
    if x_resident:
        # constant index map -> DMA'd once, stays resident for the whole grid.
        x_spec = pl.BlockSpec((mp, k_pad), lambda n, k: (0, 0))
    else:
        x_spec = pl.BlockSpec((mp, tk), lambda n, k: (0, k))

    grid_spec = pltpu.PrefetchScalarGridSpec(
        num_scalar_prefetch=0,
        grid=(ns, nk),                                   # (N-split, K-stream)
        in_specs=[
            x_spec,
            pl.BlockSpec((tk, dn), lambda n, k: (k, n)),   # w_feat: K-streamed, N-split
            pl.BlockSpec((1, dn), lambda n, k: (0, n)),    # b_feat (tiny)
        ],
        out_specs=(
            pl.BlockSpec((mp, dn), lambda n, k: (0, n)),     # per-view feats (aux)
            pl.BlockSpec((b_pad, dn), lambda n, k: (0, n)),  # view-max pooled
        ),
    )

    flops = 2 * mp * k_pad * d
    bytes_accessed = (x.size * x.dtype.itemsize + w.size * w.dtype.itemsize
                      + b_feat.size * b_feat.dtype.itemsize
                      + mp * d * 4 + b_pad * d * 4)

    return pl.pallas_call(
        _make_feat_kernel(x_resident, tk, nk),
        out_shape=(jax.ShapeDtypeStruct((mp, d), jnp.float32),
                   jax.ShapeDtypeStruct((b_pad, d), jnp.float32)),
        grid_spec=grid_spec,
        compiler_params=pltpu.CompilerParams(
            # 'parallel' N-split -> both TensorCores on v7x; harmless on v5e/v6e.
            dimension_semantics=("parallel", "arbitrary"),
            # Explicit raise needed on v5e (16 MiB scoped default); stays well
            # under the ~48 MiB budget appropriate for v7x's 64 MiB VMEM.
            vmem_limit_bytes=32 * 1024 * 1024,
        ),
        cost_estimate=pl.CostEstimate(flops=flops, transcendentals=0,
                                      bytes_accessed=bytes_accessed),
    )(x, w, b_feat)


# ---------------------------------------------------------------------------
# Kernel 2: tiny head micro-kernel (LN -> inter MLP -> both heads), <1% FLOPs
# ---------------------------------------------------------------------------
def _head_kernel(pooled_ref, wi1_ref, bi1_ref, wi2_ref, bi2_ref,
                 wh1_ref, bh1_ref, wh2_ref, bh2_ref, heads_ref):
    def ln(v):
        mu = jnp.mean(v, axis=-1, keepdims=True)
        var = jnp.mean((v - mu) ** 2, axis=-1, keepdims=True)
        return (v - mu) * jax.lax.rsqrt(var + LN_EPS)

    def dense(v, w_ref, b_ref):
        # weights stored bf16 (storage/HBM); compute kept in f32.
        return jnp.dot(v, w_ref[...].astype(jnp.float32),
                       preferred_element_type=jnp.float32) + b_ref[...]

    # self.inter = Linear(Linear(LayerNorm(pooled)))   (LN affine folded into wi1)
    inter = dense(dense(ln(pooled_ref[...]), wi1_ref, bi1_ref), wi2_ref, bi2_ref)
    # fc_offence / fc_action: shared LN (affine folded into wh1), both first
    # layers fused into one (D, 2D) matmul, both output layers into one
    # lane-dense (2D, 128) matmul+store ([off | act] packed slab).
    z = dense(ln(inter), wh1_ref, bh1_ref)
    heads_ref[...] = dense(z, wh2_ref, bh2_ref)


def _head_call(pooled, prep):
    b_pad = pooled.shape[0]
    return pl.pallas_call(
        _head_kernel,
        out_shape=jax.ShapeDtypeStruct((b_pad, HEAD_PAD), jnp.float32),
        compiler_params=pltpu.CompilerParams(vmem_limit_bytes=32 * 1024 * 1024),
    )(pooled, prep["wi1"], prep["bi1"], prep["wi2"], prep["bi2"],
      prep["wh1"], prep["bh1"], prep["wh2"], prep["bh2"])


# ---------------------------------------------------------------------------
# Parameters (torch-Linear-style uniform init; LN = ones/zeros) + kernel prep
# ---------------------------------------------------------------------------
def _linear_init(key, fan_in, fan_out):
    kw, kb = jax.random.split(key)
    bound = 1.0 / jnp.sqrt(float(fan_in))
    w = jax.random.uniform(kw, (fan_in, fan_out), jnp.float32, -bound, bound)
    b = jax.random.uniform(kb, (1, fan_out), jnp.float32, -bound, bound)
    return w, b


def init_params(key, flat_in, d):
    ks = jax.random.split(key, 8)
    p = {}
    p["w_feat"], p["b_feat"] = _linear_init(ks[0], flat_in, d)   # backbone stand-in
    ones = jnp.ones((1, d), jnp.float32)
    zeros = jnp.zeros((1, d), jnp.float32)
    p["gi"], p["bi"] = ones, zeros
    p["wi1"], p["bi1"] = _linear_init(ks[1], d, d)
    p["wi2"], p["bi2"] = _linear_init(ks[2], d, d)
    p["go"], p["bo"] = ones, zeros
    p["wo1"], p["bo1"] = _linear_init(ks[3], d, d)
    p["wo2"], p["bo2"] = _linear_init(ks[4], d, 4)
    p["ga"], p["ba"] = ones, zeros
    p["wa1"], p["ba1"] = _linear_init(ks[5], d, d)
    p["wa2"], p["ba2"] = _linear_init(ks[6], d, 8)
    return p


def _fold_ln(gamma, beta, w, b):
    # (n * gamma + beta) @ w + b  ==  n @ (gamma^T * w) + (beta @ w + b)
    return gamma.reshape(-1, 1) * w, beta @ w + b


def prepare_params(params, flat_in, tk_max=TK_MAX, n_split=2):
    """One-time packing of params into the layout the kernels consume."""
    d = FEAT_DIM
    assert d % n_split == 0 and (d // n_split) % 128 == 0
    # Pad K only to the 512 grain (not to a tk multiple); tk divides k_pad.
    k_pad = _round_up(flat_in, 512)
    tk = _pick_tk(k_pad, tk_max)

    prep = {"tk": tk, "k_pad": k_pad, "flat_in": flat_in, "n_split": n_split}
    prep["w_feat"] = jnp.pad(
        params["w_feat"], ((0, k_pad - flat_in), (0, 0))).astype(jnp.bfloat16)
    prep["b_feat"] = params["b_feat"]

    wi1, bi1 = _fold_ln(params["gi"], params["bi"], params["wi1"], params["bi1"])
    prep["wi1"], prep["bi1"] = wi1.astype(jnp.bfloat16), bi1
    prep["wi2"], prep["bi2"] = params["wi2"].astype(jnp.bfloat16), params["bi2"]

    wo1f, bo1f = _fold_ln(params["go"], params["bo"], params["wo1"], params["bo1"])
    wa1f, ba1f = _fold_ln(params["ga"], params["ba"], params["wa1"], params["ba1"])
    prep["wh1"] = jnp.concatenate([wo1f, wa1f], axis=1).astype(jnp.bfloat16)  # (D, 2D)
    prep["bh1"] = jnp.concatenate([bo1f, ba1f], axis=1)                       # (1, 2D)

    wh2 = jnp.zeros((2 * d, HEAD_PAD), jnp.float32)
    wh2 = wh2.at[:d, 0:4].set(params["wo2"]).at[d:, 4:12].set(params["wa2"])
    bh2 = jnp.zeros((1, HEAD_PAD), jnp.float32)
    bh2 = bh2.at[:, 0:4].set(params["bo2"]).at[:, 4:12].set(params["ba2"])
    prep["wh2"], prep["bh2"] = wh2.astype(jnp.bfloat16), bh2
    return prep


# ---------------------------------------------------------------------------
# Forward (mirrors MVNetwork.forward -> MVAggregate.forward)
# ---------------------------------------------------------------------------
def mvnetwork_forward(mvimages, prep):
    B, V, C, T, H, W = mvimages.shape
    d = FEAT_DIM
    flat_in = C * T * H * W
    assert flat_in == prep["flat_in"]
    b_pad = _round_up(B, 8)
    k_pad = prep["k_pad"]
    mp = V * b_pad

    # batch_tensor(mvimages, dim=1) + flatten per view; rows laid out view-major
    # (v, b) and zero-padded so per-batch slices are sublane aligned and K is a
    # multiple of 512 (zero pad does not change the matmul).
    x = jnp.transpose(mvimages.reshape(B, V, flat_in), (1, 0, 2))
    x = jnp.pad(x, ((0, 0), (0, b_pad - B), (0, k_pad - flat_in)))
    x = x.reshape(mp, k_pad).astype(jnp.bfloat16)

    feats, pooled = _feat_call(x, prep, b_pad)     # hot HBM-BW-bound kernel
    heads = _head_call(pooled, prep)               # tiny head micro-kernel

    # unbatch_tensor + lifting_net (identity); drop padding rows, un-transpose.
    aux = jnp.transpose(feats.reshape(V, b_pad, d)[:, :B, :], (1, 0, 2))   # (B, V, D)
    pred_offence_severity = heads[:B, 0:4]
    pred_action = heads[:B, 4:12]
    return pred_offence_severity, pred_action, aux


# ---------------------------------------------------------------------------
# Pure-JAX reference (same bf16 weight quantisation) for correctness checking
# ---------------------------------------------------------------------------
def _reference_forward(mvimages, params):
    B, V, C, T, H, W = mvimages.shape
    flat_in = C * T * H * W

    def ln(x, g, b):
        mu = jnp.mean(x, -1, keepdims=True)
        var = jnp.mean((x - mu) ** 2, -1, keepdims=True)
        return (x - mu) * jax.lax.rsqrt(var + LN_EPS) * g + b

    def q(w):   # mirror the kernel's bf16 weight storage
        return w.astype(jnp.bfloat16).astype(jnp.float32)

    x = mvimages.reshape(B * V, flat_in).astype(jnp.bfloat16).astype(jnp.float32)
    feats = x @ q(params["w_feat"]) + params["b_feat"]
    aux = feats.reshape(B, V, FEAT_DIM)
    pooled = jnp.max(aux, axis=1)

    h = ln(pooled, params["gi"], params["bi"]) @ q(params["wi1"]) + params["bi1"]
    inter = h @ q(params["wi2"]) + params["bi2"]
    ho = ln(inter, params["go"], params["bo"]) @ q(params["wo1"]) + params["bo1"]
    off = ho @ q(params["wo2"]) + params["bo2"]
    ha = ln(inter, params["ga"], params["ba"]) @ q(params["wa1"]) + params["ba1"]
    act = ha @ q(params["wa2"]) + params["ba2"]
    return off, act, aux


if __name__ == "__main__":
    key = jax.random.PRNGKey(0)
    B, V, C, T, H, W = 2, 2, 3, 4, 16, 16
    k_x, k_p = jax.random.split(key)
    mvimages = jax.random.normal(k_x, (B, V, C, T, H, W), jnp.float32)

    flat_in = C * T * H * W
    params = init_params(k_p, flat_in, FEAT_DIM)
    prep = prepare_params(params, flat_in)

    pred_offence_severity, pred_action, attention = mvnetwork_forward(mvimages, prep)
    jax.block_until_ready((pred_offence_severity, pred_action, attention))

    ref_off, ref_act, ref_aux = _reference_forward(mvimages, params)

    assert pred_offence_severity.shape == (B, 4)
    assert pred_action.shape == (B, 8)
    assert attention.shape == (B, V, FEAT_DIM)
    assert jnp.all(jnp.isfinite(pred_offence_severity))
    assert jnp.all(jnp.isfinite(pred_action))
    assert jnp.allclose(pred_offence_severity, ref_off, rtol=2e-2, atol=2e-2)
    assert jnp.allclose(pred_action, ref_act, rtol=2e-2, atol=2e-2)
    assert jnp.allclose(attention, ref_aux, rtol=2e-2, atol=2e-2)
    print("KERNEL_OK")
</pallas_src>

<mosaic_0001>
module attributes {stable_mosaic.version = 11 : i64} {
  func.func @kernel(%arg0: i32, %arg1: i32, %arg2: memref<16x3072xbf16, #tpu.memory_space<vmem>>, %arg3: memref<3072x256xbf16, #tpu.memory_space<vmem>>, %arg4: memref<1x256xf32, #tpu.memory_space<vmem>>, %arg5: memref<16x256xf32, #tpu.memory_space<vmem>>, %arg6: memref<8x256xf32, #tpu.memory_space<vmem>>) attributes {dimension_semantics = [#tpu.dimension_semantics<parallel>, #tpu.dimension_semantics<arbitrary>], iteration_bounds = array<i64: 2, 1>, scalar_prefetch = 0 : i64, scratch_operands = 0 : i64, tpu.core_type = #tpu.core_type<tc>, window_params = [{pipeline_mode = #tpu.pipeline_mode<synchronous>, transform_indices = @transform_0, window_bounds = array<i64: 16, 3072>}, {transform_indices = @transform_1, window_bounds = array<i64: 3072, 256>}, {transform_indices = @transform_2, window_bounds = array<i64: 1, 256>}, {transform_indices = @transform_3, window_bounds = array<i64: 16, 256>}, {transform_indices = @transform_4, window_bounds = array<i64: 8, 256>}]} {
    %c0_i32 = arith.constant 0 : i32
    %0 = arith.cmpi eq, %arg1, %c0_i32 : i32
    %1 = arith.extui %0 : i1 to i32
    %c0_i32_0 = arith.constant 0 : i32
    %2 = arith.cmpi ne, %1, %c0_i32_0 : i32
    scf.if %2 {
      %cst_10 = arith.constant 0.000000e+00 : f32
      %12 = vector.broadcast %cst_10 : f32 to vector<16x256xf32>
      %c0_11 = arith.constant 0 : index
      %c0_12 = arith.constant 0 : index
      %13 = vector.load %arg5[%c0_11, %c0_12] : memref<16x256xf32, #tpu.memory_space<vmem>>, vector<16x256xf32>
      tpu.vector_store %arg5[%c0_11, %c0_12], %12 {strides = array<i32>} : memref<16x256xf32, #tpu.memory_space<vmem>>, vector<16x256xf32>,
    } else {
    }
    %c0 = arith.constant 0 : index
    %c0_1 = arith.constant 0 : index
    %3 = vector.load %arg2[%c0, %c0_1] : memref<16x3072xbf16, #tpu.memory_space<vmem>>, vector<16x3072xbf16>
    %c0_2 = arith.constant 0 : index
    %c0_3 = arith.constant 0 : index
    %4 = vector.load %arg5[%c0_2, %c0_3] : memref<16x256xf32, #tpu.memory_space<vmem>>, vector<16x256xf32>
    %c0_4 = arith.constant 0 : index
    %c0_5 = arith.constant 0 : index
    %5 = vector.load %arg3[%c0_4, %c0_5] : memref<3072x256xbf16, #tpu.memory_space<vmem>>, vector<3072x256xbf16>
    %cst = arith.constant dense<0.000000e+00> : vector<16x256xf32>
    %6 = tpu.matmul %3, %5, %cst {dimension_numbers = #tpu.dot_dimension_numbers<[1], [0], [0], [1], [0, 0, 1, 1], [], []>} : vector<16x3072xbf16>, vector<3072x256xbf16>, vector<16x256xf32> -> vector<16x256xf32>
    %7 = arith.addf %4, %6 : vector<16x256xf32>
    %c0_6 = arith.constant 0 : index
    %c0_7 = arith.constant 0 : index
    %8 = vector.load %arg5[%c0_6, %c0_7] : memref<16x256xf32, #tpu.memory_space<vmem>>, vector<16x256xf32>
    tpu.vector_store %arg5[%c0_6, %c0_7], %7 {strides = array<i32>} : memref<16x256xf32, #tpu.memory_space<vmem>>, vector<16x256xf32>,
    %c0_i32_8 = arith.constant 0 : i32
    %9 = arith.cmpi eq, %arg1, %c0_i32_8 : i32
    %10 = arith.extui %9 : i1 to i32
    %c0_i32_9 = arith.constant 0 : i32
    %11 = arith.cmpi ne, %10, %c0_i32_9 : i32
    scf.if %11 {
      %c0_10 = arith.constant 0 : index
      %c0_11 = arith.constant 0 : index
      %12 = vector.load %arg5[%c0_10, %c0_11] : memref<16x256xf32, #tpu.memory_space<vmem>>, vector<16x256xf32>
      %c0_12 = arith.constant 0 : index
      %c0_13 = arith.constant 0 : index
      %13 = vector.load %arg4[%c0_12, %c0_13] : memref<1x256xf32, #tpu.memory_space<vmem>>, vector<1x256xf32>
      %14 = vector.broadcast %13 : vector<1x256xf32> to vector<16x256xf32>
      %15 = arith.addf %12, %14 : vector<16x256xf32>
      %c0_14 = arith.constant 0 : index
      %c0_15 = arith.constant 0 : index
      %16 = vector.load %arg5[%c0_14, %c0_15] : memref<16x256xf32, #tpu.memory_space<vmem>>, vector<16x256xf32>
      tpu.vector_store %arg5[%c0_14, %c0_15], %15 {strides = array<i32>} : memref<16x256xf32, #tpu.memory_space<vmem>>, vector<16x256xf32>,
      %17 = vector.extract_strided_slice %15 {offsets = [0, 0], sizes = [8, 256], strides = [1, 1]} : vector<16x256xf32> to vector<8x256xf32>
      %18 = vector.extract_strided_slice %15 {offsets = [8, 0], sizes = [8, 256], strides = [1, 1]} : vector<16x256xf32> to vector<8x256xf32>
      %19 = arith.maximumf %17, %18 : vector<8x256xf32>
      %c0_16 = arith.constant 0 : index
      %c0_17 = arith.constant 0 : index
      %20 = vector.load %arg6[%c0_16, %c0_17] : memref<8x256xf32, #tpu.memory_space<vmem>>, vector<8x256xf32>
      tpu.vector_store %arg6[%c0_16, %c0_17], %19 {strides = array<i32>} : memref<8x256xf32, #tpu.memory_space<vmem>>, vector<8x256xf32>,
    } else {
    }
    return
  }
  func.func @transform_0(%arg0: i32, %arg1: i32) -> (i32, i32) {
    %c0_i32 = arith.constant 0 : i32
    %c0_i32_0 = arith.constant 0 : i32
    %c0_i32_1 = arith.constant 0 : i32
    return %c0_i32, %c0_i32_0 : i32, i32
  }
  func.func @transform_1(%arg0: i32, %arg1: i32) -> (i32, i32) {
    %c0_i32 = arith.constant 0 : i32
    return %arg1, %arg0 : i32, i32
  }
  func.func @transform_2(%arg0: i32, %arg1: i32) -> (i32, i32) {
    %c0_i32 = arith.constant 0 : i32
    %c0_i32_0 = arith.constant 0 : i32
    return %c0_i32, %arg0 : i32, i32
  }
  func.func @transform_3(%arg0: i32, %arg1: i32) -> (i32, i32) {
    %c0_i32 = arith.constant 0 : i32
    %c0_i32_0 = arith.constant 0 : i32
    return %c0_i32, %arg0 : i32, i32
  }
  func.func @transform_4(%arg0: i32, %arg1: i32) -> (i32, i32) {
    %c0_i32 = arith.constant 0 : i32
    %c0_i32_0 = arith.constant 0 : i32
    return %c0_i32, %arg0 : i32, i32
  }
}

</mosaic_0001>

<llo_original>
// kernel: tpu_custom_call.1
$region0: #{tpu_custom_call.1}
  #allocation0 [shape = 'u32[]', space=smem, size = 0x4, offset = 0x4, fixed_abs, tag = 'smem constant byte address 0x4 - core index']
  #allocation1 [shape = 'u32[72,128]{1,0:T(1,128)}', space=vmem, size = 0x9000, scoped, tag = 'internal scratch']
  %s0 = inlined_call_operand.hbm [shape: bf16[16,3072], index: 0, kind: input, shape index: {}]
  %s1 = inlined_call_operand.hbm [shape: bf16[3072,512], index: 1, kind: input, shape index: {}]
  %s2 = inlined_call_operand.hbm [shape: f32[1,512], index: 2, kind: input, shape index: {}]
  %s3 = inlined_call_operand.hbm [shape: f32[16,512], index: 3, kind: output, shape index: {0}]
  %s4 = inlined_call_operand.hbm [shape: f32[8,512], index: 4, kind: output, shape index: {1}]
  %5 = xla_tuple %s3, %s4
  %s6 = sld [smem:[#allocation0]]
  $region73: #{tpu_custom_call.1} parent=0
    _
  %s8 = ssub.s32 1, %s6
  %s9 = scalar_select 0, %s8, %s6
  $region1: #{tpu_custom_call.1} parent=0
    #allocation2 [shape = 'u8[98304]{0}', space=vmem, size = 0x18000, scoped, tag = 'input window, operand 0, single buffered']
    #allocation3 [shape = 's32[2]{0}', space=sflag, size = 0x8, scoped, tag = 'scoped memory for tpu_custom_call.1']
    #allocation4 [shape = 's32[2]{0}', space=sflag, size = 0x8, scoped, tag = 'scoped memory for tpu_custom_call.1']
    #allocation5 [shape = 'u8[3145728]{0}', space=vmem, size = 0x300000, scoped, tag = 'input window, operand 1']
    #allocation6 [shape = 's32[2]{0}', space=sflag, size = 0x8, scoped, tag = 'scoped memory for tpu_custom_call.1']
    #allocation7 [shape = 'u8[2048]{0}', space=vmem, size = 0x800, scoped, tag = 'input window, operand 2']
    #allocation8 [shape = 'u8[32768]{0}', space=vmem, size = 0x8000, scoped, tag = 'output window, operand 0']
    #allocation9 [shape = 'u8[16384]{0}', space=vmem, size = 0x4000, scoped, tag = 'output window, operand 1']
    #allocation10 [shape = 's32[2]{0}', space=sflag, size = 0x8, scoped, tag = 'scoped memory for tpu_custom_call.1']
    %10 = vsyncpa [#allocation3], 0
    %11 = vsyncpa [#allocation6], 0
    %s12 = scalar_lea.sflag [#allocation6], 1
    %13 = vsyncpa %s12, 0
    %14 = vsyncpa [#allocation4], 0
    %s15 = scalar_lea.sflag [#allocation4], 1
    %16 = vsyncpa %s15, 0
    %17 = vsyncpa [#allocation10], 0
    %s18 = scalar_lea.sflag [#allocation10], 1
    %19 = vsyncpa %s18, 0
    loop: start=0, step=1, limit=4
    $region2: #{tpu_custom_call.1} parent=1 // loop_pre_header
      _
    $region3: #{tpu_custom_call.1} parent=1 // loop_header
      %s21 = sphi 0, %s25
      %p22 = scmp.ge.s32.totalorder %s21, 4
      %s28 = sphi 0, %s40
      %s29 = sphi 0, %s36
      %s30 = sphi 0, %s28
      %s31 = sphi 0, %s29
      %s32 = sphi 0, %s30
      %s33 = sphi 0, %s31
      %s41 = sphi 0, %s41
      %s43 = sphi 0, %s41
      %s44 = sphi 0, %s43
      %s58 = sphi 0, %s44
      %s66 = sphi 0, %s68
      %s69 = sphi 0, %s66
      %s70 = sphi 0, %s69
      %s86 = sphi 0, %s70
      %s92 = sphi 0, %s94
      %s95 = sphi 0, %s92
      %s96 = sphi 0, %s95
      %s112 = sphi 0, %s96
      %s118 = sphi 0, %s120
      %s121 = sphi 0, %s118
      %s122 = sphi 0, %s121
      %s138 = sphi 0, %s122
      %s144 = sphi 0, %s146
      %s147 = sphi 0, %s144
      %s148 = sphi 0, %s147
      %s164 = sphi 0, %s148
    $region4: #{tpu_custom_call.1} parent=1 // loop_header_branch
      %24 = sbr.rel (%p22) target = $region8
    $region5: #{tpu_custom_call.1} parent=1 // loop_body
      %s26 = ssub.s32 %s21, 1
      %s27 = ssub.s32 %s21, 2
      %s34 = sadd.s32 1, %s29
      %p35 = scmp.ge.s32.totalorder %s34, 1
      %s36 = scalar_select %p35, 0, %s34
      %s37 = sadd.s32 1, %s28
      %s38 = scalar_select %p35, %s37, %s28
      %p39 = scmp.ge.s32.totalorder %s38, 2
      %s40 = scalar_select %p39, 0, %s38
      %s42 = sadd.s32 %s41, 1
      %p45 = scmp.eq.s32.totalorder %s21, 1
      %p46 = scmp.ne.s32.totalorder %s41, %s43
      %p47 = scmp.eq.s32.totalorder %s21, 0
      %p48 = por %p46, %p47
      %p49 = scmp.ne.s32.totalorder %s41, %s43
      %p50 = scmp.eq.s32.totalorder %s26, 1
      %p51 = por %p49, %p50
      %p52 = scmp.ne.s32.totalorder %s43, %s44
      %p53 = scmp.eq.s32.totalorder %s26, 0
      %p54 = por %p52, %p53
      %p55 = scmp.ne.s32.totalorder %s43, %s44
      %p56 = scmp.eq.s32.totalorder %s27, 1
      %p57 = por %p55, %p56
      %p59 = scmp.ne.s32.totalorder %s44, %s58
      %p60 = scmp.eq.s32.totalorder %s27, 0
      %p61 = por %p59, %p60
      %s62 = ssub.s32 %s29, %s36
      %s63 = ssub.s32 %s28, %s40
      %s64 = sor.u32 %s62, %s63
      %p65 = scmp.eq.s32.totalorder %s64, 0
      %s67 = sadd.s32 %s66, 1
      %s68 = scalar_select %p65, %s66, %s67
      %p71 = pneg %p65
      %p72 = scmp.eq.s32.totalorder %s21, 1
      %p73 = por %p71, %p72
      %p74 = scmp.ne.s32.totalorder %s66, %s69
      %p75 = scmp.eq.s32.totalorder %s21, 0
      %p76 = por %p74, %p75
      %p77 = scmp.ne.s32.totalorder %s66, %s69
      %p78 = scmp.eq.s32.totalorder %s26, 1
      %p79 = por %p77, %p78
      %p80 = scmp.ne.s32.totalorder %s69, %s70
      %p81 = scmp.eq.s32.totalorder %s26, 0
      %p82 = por %p80, %p81
      %p83 = scmp.ne.s32.totalorder %s69, %s70
      %p84 = scmp.eq.s32.totalorder %s27, 1
      %p85 = por %p83, %p84
      %p87 = scmp.ne.s32.totalorder %s70, %s86
      %p88 = scmp.eq.s32.totalorder %s27, 0
      %p89 = por %p87, %p88
      %s90 = ssub.s32 %s28, %s40
      %p91 = scmp.eq.s32.totalorder %s90, 0
      %s93 = sadd.s32 %s92, 1
      %s94 = scalar_select %p91, %s92, %s93
      %p97 = pneg %p91
      %p98 = scmp.eq.s32.totalorder %s21, 1
      %p99 = por %p97, %p98
      %p100 = scmp.ne.s32.totalorder %s92, %s95
      %p101 = scmp.eq.s32.totalorder %s21, 0
      %p102 = por %p100, %p101
      %p103 = scmp.ne.s32.totalorder %s92, %s95
      %p104 = scmp.eq.s32.totalorder %s26, 1
      %p105 = por %p103, %p104
      %p106 = scmp.ne.s32.totalorder %s95, %s96
      %p107 = scmp.eq.s32.totalorder %s26, 0
      %p108 = por %p106, %p107
      %p109 = scmp.ne.s32.totalorder %s95, %s96
      %p110 = scmp.eq.s32.totalorder %s27, 1
      %p111 = por %p109, %p110
      %p113 = scmp.ne.s32.totalorder %s96, %s112
      %p114 = scmp.eq.s32.totalorder %s27, 0
      %p115 = por %p113, %p114
      %s116 = ssub.s32 %s28, %s40
      %p117 = scmp.eq.s32.totalorder %s116, 0
      %s119 = sadd.s32 %s118, 1
      %s120 = scalar_select %p117, %s118, %s119
      %p123 = pneg %p117
      %p124 = scmp.eq.s32.totalorder %s21, 1
      %p125 = por %p123, %p124
      %p126 = scmp.ne.s32.totalorder %s118, %s121
      %p127 = scmp.eq.s32.totalorder %s21, 0
      %p128 = por %p126, %p127
      %p129 = scmp.ne.s32.totalorder %s118, %s121
      %p130 = scmp.eq.s32.totalorder %s26, 1
      %p131 = por %p129, %p130
      %p132 = scmp.ne.s32.totalorder %s121, %s122
      %p133 = scmp.eq.s32.totalorder %s26, 0
      %p134 = por %p132, %p133
      %p135 = scmp.ne.s32.totalorder %s121, %s122
      %p136 = scmp.eq.s32.totalorder %s27, 1
      %p137 = por %p135, %p136
      %p139 = scmp.ne.s32.totalorder %s122, %s138
      %p140 = scmp.eq.s32.totalorder %s27, 0
      %p141 = por %p139, %p140
      %s142 = ssub.s32 %s28, %s40
      %p143 = scmp.eq.s32.totalorder %s142, 0
      %s145 = sadd.s32 %s144, 1
      %s146 = scalar_select %p143, %s144, %s145
      %p149 = pneg %p143
      %p150 = scmp.eq.s32.totalorder %s21, 1
      %p151 = por %p149, %p150
      %p152 = scmp.ne.s32.totalorder %s144, %s147
      %p153 = scmp.eq.s32.totalorder %s21, 0
      %p154 = por %p152, %p153
      %p155 = scmp.ne.s32.totalorder %s144, %s147
      %p156 = scmp.eq.s32.totalorder %s26, 1
      %p157 = por %p155, %p156
      %p158 = scmp.ne.s32.totalorder %s147, %s148
      %p159 = scmp.eq.s32.totalorder %s26, 0
      %p160 = por %p158, %p159
      %p161 = scmp.ne.s32.totalorder %s147, %s148
      %p162 = scmp.eq.s32.totalorder %s27, 1
      %p163 = por %p161, %p162
      %p165 = scmp.ne.s32.totalorder %s148, %s164
      %p166 = scmp.eq.s32.totalorder %s27, 0
      %p167 = por %p165, %p166
      %p168 = scmp.le.s32.totalorder 1, %s21
      %p169 = scmp.lt.s32.totalorder %s21, 3
      %p170 = pnand %p168, %p169
      %p171 = pneg %p170
      // Predicated region
      $region9: #{tpu_custom_call.1} parent=5 // pred_check
        _
      $region10: #{tpu_custom_call.1} parent=5 // pred_check_branch
        %173 = sbr.rel (%p170) target = $region12
      $region11: #{tpu_custom_call.1} parent=5 // pred_region
        %s174 = ssub.s32 %s21, 1
        // Predicated region
        $region13: #{tpu_custom_call.1} parent=11 // pred_check
          %p175 = pneg %p54
        $region14: #{tpu_custom_call.1} parent=11 // pred_check_branch
          %177 = sbr.rel (%p175) target = $region16
        $region15: #{tpu_custom_call.1} parent=11 // pred_region
          %179 = vsyncadd [#allocation3], 0
          %s180 = sshll.u32 %s0, 4
          %s181 = int_to_ptr.hbm [resolvable:$true] %s180
          %s182 = sshll.u32 [#allocation2], 4
          %s183 = int_to_ptr.vmem [resolvable:$true] %s182
          %188 = dma.hbm_to_vmem [thread:$0]  %s181, 3072, %s183, [#allocation3], 1536, 1536, 96
        $region16: #{tpu_custom_call.1} parent=11 // pred_fallthru
          _
      $region12: #{tpu_custom_call.1} parent=5 // pred_fallthru
        _
      %p189 = scmp.lt.s32.totalorder %s21, 2
      // Predicated region
      $region17: #{tpu_custom_call.1} parent=5 // pred_check
        %p190 = pneg %p189
      $region18: #{tpu_custom_call.1} parent=5 // pred_check_branch
        %192 = sbr.rel (%p190) target = $region20
      $region19: #{tpu_custom_call.1} parent=5 // pred_region
        // Predicated region
        $region21: #{tpu_custom_call.1} parent=19 // pred_check
          %p193 = pneg %p76
        $region22: #{tpu_custom_call.1} parent=19 // pred_check_branch
          %195 = sbr.rel (%p193) target = $region24
        $region23: #{tpu_custom_call.1} parent=19 // pred_region
          %s196 = sand.u32 %s21, 1
          %s197 = scalar_lea.sflag [#allocation6], %s196
          %s198 = sand.u32 %s66, 1
          %s199 = smul.addr %s198, 3072
          %s200 = scalar_lea.vmem [#allocation5], %s199
          %s201 = smul.u32 384, %s29
          %s202 = smul.u32 2, %s28
          %204 = vsyncadd %s197, 0
          %s205 = smul.addr %s201, 4
          %s206 = sadd.s32 %s202, %s205
          %s207 = smul.addr %s206, 4
          %s208 = scalar_lea.hbm %s1, %s207
          %s209 = sshll.u32 %s208, 4
          %s210 = int_to_ptr.hbm [resolvable:$true] %s209
          %s211 = sshll.u32 %s200, 4
          %s212 = int_to_ptr.vmem [resolvable:$true] %s211
          %217 = dma.hbm_to_vmem [thread:$0]  %s210, 49152, %s212, %s197, 256, 128, 8
        $region24: #{tpu_custom_call.1} parent=19 // pred_fallthru
          _
        // Predicated region
        $region25: #{tpu_custom_call.1} parent=19 // pred_check
          %p218 = pneg %p102
        $region26: #{tpu_custom_call.1} parent=19 // pred_check_branch
          %220 = sbr.rel (%p218) target = $region28
        $region27: #{tpu_custom_call.1} parent=19 // pred_region
          %s221 = sand.u32 %s21, 1
          %s222 = scalar_lea.sflag [#allocation6], %s221
          %s223 = sand.u32 %s92, 1
          %s224 = smul.addr %s223, 2
          %s225 = scalar_lea.vmem [#allocation7], %s224
          %s226 = smul.u32 2, %s28
          %228 = vsyncadd %s222, 0
          %s229 = scalar_lea.hbm %s2, %s226
          %s231 = sshll.u32 %s229, 4
          %s232 = int_to_ptr.hbm [resolvable:$true] %s231
          %s233 = sshll.u32 %s225, 4
          %s234 = int_to_ptr.vmem [resolvable:$true] %s233
          %236 = dma.hbm_to_vmem [thread:$0]  %s232, 32, %s234, %s222
        $region28: #{tpu_custom_call.1} parent=19 // pred_fallthru
          _
      $region20: #{tpu_custom_call.1} parent=5 // pred_fallthru
        _
      %p237 = scmp.le.s32.totalorder 1, %s21
      %p238 = scmp.lt.s32.totalorder %s21, 3
      %p239 = pnand %p237, %p238
      %p240 = pneg %p239
      // Predicated region
      $region29: #{tpu_custom_call.1} parent=5 // pred_check
        _
      $region30: #{tpu_custom_call.1} parent=5 // pred_check_branch
        %242 = sbr.rel (%p239) target = $region32
      $region31: #{tpu_custom_call.1} parent=5 // pred_region
        %s243 = ssub.s32 %s21, 1
        // Predicated region
        $region33: #{tpu_custom_call.1} parent=31 // pred_check
          %p244 = pneg %p54
        $region34: #{tpu_custom_call.1} parent=31 // pred_check_branch
          %246 = sbr.rel (%p244) target = $region36
        $region35: #{tpu_custom_call.1} parent=31 // pred_region
          %248 = dma.done [#allocation3], 3072
        $region36: #{tpu_custom_call.1} parent=31 // pred_fallthru
          _
        %s249 = sand.u32 %s26, 1
        %s250 = scalar_lea.sflag [#allocation6], %s249
        %s251 = sand.u32 %s69, 1
        %s252 = smul.addr %s251, 3072
        %s253 = scalar_lea.vmem [#allocation5], %s252
        // Predicated region
        $region37: #{tpu_custom_call.1} parent=31 // pred_check
          %p254 = pneg %p82
        $region38: #{tpu_custom_call.1} parent=31 // pred_check_branch
          %256 = sbr.rel (%p254) target = $region40
        $region39: #{tpu_custom_call.1} parent=31 // pred_region
          %258 = dma.done %s250, 49152
        $region40: #{tpu_custom_call.1} parent=31 // pred_fallthru
          _
        %s259 = sand.u32 %s26, 1
        %s260 = scalar_lea.sflag [#allocation6], %s259
        %s261 = sand.u32 %s95, 1
        %s262 = smul.addr %s261, 2
        %s263 = scalar_lea.vmem [#allocation7], %s262
        // Predicated region
        $region41: #{tpu_custom_call.1} parent=31 // pred_check
          %p264 = pneg %p108
        $region42: #{tpu_custom_call.1} parent=31 // pred_check_branch
          %266 = sbr.rel (%p264) target = $region44
        $region43: #{tpu_custom_call.1} parent=31 // pred_region
          %268 = dma.done %s260, 32
        $region44: #{tpu_custom_call.1} parent=31 // pred_fallthru
          _
        %p269 = pneg %p54
        %p270 = pneg %p51
        %s271 = sand.u32 %s26, 1
        %s272 = scalar_lea.sflag [#allocation6], %s271
        %s273 = sand.u32 %s69, 1
        %s274 = smul.addr %s273, 3072
        %s275 = scalar_lea.vmem [#allocation5], %s274
        %p276 = pneg %p82
        %p277 = pneg %p79
        %s278 = sand.u32 %s26, 1
        %s279 = scalar_lea.sflag [#allocation6], %s278
        %s280 = sand.u32 %s95, 1
        %s281 = smul.addr %s280, 2
        %s282 = scalar_lea.vmem [#allocation7], %s281
        %p283 = pneg %p108
        %p284 = pneg %p105
        %p285 = pneg %p134
        %p286 = pneg %p131
        %s287 = sand.u32 %s121, 1
        %s288 = scalar_lea.sflag [#allocation4], %s287
        %s289 = sand.u32 %s121, 1
        %s290 = smul.addr %s289, 32
        %s291 = scalar_lea.vmem [#allocation8], %s290
        %p292 = pneg %p160
        %p293 = pneg %p157
        %s294 = sand.u32 %s147, 1
        %s295 = scalar_lea.sflag [#allocation10], %s294
        %s296 = sand.u32 %s147, 1
        %s297 = smul.addr %s296, 16
        %s298 = scalar_lea.vmem [#allocation9], %s297
        %s299 = smul.u32 384, %s31
        %s300 = smul.u32 2, %s30
        %s301 = smul.u32 2, %s30
        %s302 = smul.u32 2, %s30
        %s303 = smul.u32 2, %s30
        %p304 = scmp.eq.s32.totalorder %s31, 0
        // Predicated region
        $region45: #{tpu_custom_call.1} parent=31 // pred_check
          %p305 = pneg %p304
        $region46: #{tpu_custom_call.1} parent=31 // pred_check_branch
          %307 = sbr.rel (%p305) target = $region48
        $region47: #{tpu_custom_call.1} parent=31 // pred_region
          %308 = vst [vmem:[%s291] sm:$0xff] 0.0
          %309 = vst [vmem:[%s291 + $0x8] sm:$0xff] 0.0
          %310 = vst [vmem:[%s291 + $0x10] sm:$0xff] 0.0
          %311 = vst [vmem:[%s291 + $0x18] sm:$0xff] 0.0
        $region48: #{tpu_custom_call.1} parent=31 // pred_fallthru
          _
        %v312 = vld [vmem:[#allocation2] sm:$0xff]
        %v313 = vld [vmem:[#allocation2 + $0x8] sm:$0xff]
        %v314 = vld [vmem:[#allocation2 + $0x10] sm:$0xff]
        %v315 = vld [vmem:[#allocation2 + $0x18] sm:$0xff]
        %v316 = vld [vmem:[#allocation2 + $0x20] sm:$0xff]
        %v317 = vld [vmem:[#allocation2 + $0x28] sm:$0xff]
        %v318 = vld [vmem:[#allocation2 + $0x30] sm:$0xff]
        %v319 = vld [vmem:[#allocation2 + $0x38] sm:$0xff]
        %v320 = vld [vmem:[#allocation2 + $0x40] sm:$0xff]
        %v321 = vld [vmem:[#allocation2 + $0x48] sm:$0xff]
        %v322 = vld [vmem:[#allocation2 + $0x50] sm:$0xff]
        %v323 = vld [vmem:[#allocation2 + $0x58] sm:$0xff]
        %v324 = vld [vmem:[#allocation2 + $0x60] sm:$0xff]
        %v325 = vld [vmem:[#allocation2 + $0x68] sm:$0xff]
        %v326 = vld [vmem:[#allocation2 + $0x70] sm:$0xff]
        %v327 = vld [vmem:[#allocation2 + $0x78] sm:$0xff]
        %v328 = vld [vmem:[#allocation2 + $0x80] sm:$0xff]
        %v329 = vld [vmem:[#allocation2 + $0x88] sm:$0xff]
        %v330 = vld [vmem:[#allocation2 + $0x90] sm:$0xff]
        %v331 = vld [vmem:[#allocation2 + $0x98] sm:$0xff]
        %v332 = vld [vmem:[#allocation2 + $0xa0] sm:$0xff]
        %v333 = vld [vmem:[#allocation2 + $0xa8] sm:$0xff]
        %v334 = vld [vmem:[#allocation2 + $0xb0] sm:$0xff]
        %v335 = vld [vmem:[#allocation2 + $0xb8] sm:$0xff]
        %v336 = vld [vmem:[%s291] sm:$0xff]
        %v337 = vld [vmem:[%s291 + $0x8] sm:$0xff]
        %v338 = vld [vmem:[%s291 + $0x10] sm:$0xff]
        %v339 = vld [vmem:[%s291 + $0x18] sm:$0xff]
        %v340 = vld [vmem:[%s253] sm:$0xff]
        %v341 = vld [vmem:[%s253 + $0x8] sm:$0xff]
        %v342 = vld [vmem:[%s253 + $0x10] sm:$0xff]
        %v343 = vld [vmem:[%s253 + $0x18] sm:$0xff]
        %v344 = vld [vmem:[%s253 + $0x20] sm:$0xff]
        %v345 = vld [vmem:[%s253 + $0x28] sm:$0xff]
        %v346 = vld [vmem:[%s253 + $0x30] sm:$0xff]
        %v347 = vld [vmem:[%s253 + $0x38] sm:$0xff]
        %v348 = vld [vmem:[%s253 + $0x40] sm:$0xff]
        %v349 = vld [vmem:[%s253 + $0x48] sm:$0xff]
        %v350 = vld [vmem:[%s253 + $0x50] sm:$0xff]
        %v351 = vld [vmem:[%s253 + $0x58] sm:$0xff]
        %v352 = vld [vmem:[%s253 + $0x60] sm:$0xff]
        %v353 = vld [vmem:[%s253 + $0x68] sm:$0xff]
        %v354 = vld [vmem:[%s253 + $0x70] sm:$0xff]
        %v355 = vld [vmem:[%s253 + $0x78] sm:$0xff]
        %v356 = vld [vmem:[%s253 + $0x80] sm:$0xff]
        %v357 = vld [vmem:[%s253 + $0x88] sm:$0xff]
        %v358 = vld [vmem:[%s253 + $0x90] sm:$0xff]
        %v359 = vld [vmem:[%s253 + $0x98] sm:$0xff]
        %v360 = vld [vmem:[%s253 + $0xa0] sm:$0xff]
        %v361 = vld [vmem:[%s253 + $0xa8] sm:$0xff]
        %v362 = vld [vmem:[%s253 + $0xb0] sm:$0xff]
        %v363 = vld [vmem:[%s253 + $0xb8] sm:$0xff]
        %v364 = vld [vmem:[%s253 + $0xc0] sm:$0xff]
        %v365 = vld [vmem:[%s253 + $0xc8] sm:$0xff]
        %v366 = vld [vmem:[%s253 + $0xd0] sm:$0xff]
        %v367 = vld [vmem:[%s253 + $0xd8] sm:$0xff]
        %v368 = vld [vmem:[%s253 + $0xe0] sm:$0xff]
        %v369 = vld [vmem:[%s253 + $0xe8] sm:$0xff]
        %v370 = vld [vmem:[%s253 + $0xf0] sm:$0xff]
        %v371 = vld [vmem:[%s253 + $0xf8] sm:$0xff]
        %v372 = vld [vmem:[%s253 + $0x100] sm:$0xff]
        %v373 = vld [vmem:[%s253 + $0x108] sm:$0xff]
        %v374 = vld [vmem:[%s253 + $0x110] sm:$0xff]
        %v375 = vld [vmem:[%s253 + $0x118] sm:$0xff]
        %v376 = vld [vmem:[%s253 + $0x120] sm:$0xff]
        %v377 = vld [vmem:[%s253 + $0x128] sm:$0xff]
        %v378 = vld [vmem:[%s253 + $0x130] sm:$0xff]
        %v379 = vld [vmem:[%s253 + $0x138] sm:$0xff]
        %v380 = vld [vmem:[%s253 + $0x140] sm:$0xff]
        %v381 = vld [vmem:[%s253 + $0x148] sm:$0xff]
        %v382 = vld [vmem:[%s253 + $0x150] sm:$0xff]
        %v383 = vld [vmem:[%s253 + $0x158] sm:$0xff]
        %v384 = vld [vmem:[%s253 + $0x160] sm:$0xff]
        %v385 = vld [vmem:[%s253 + $0x168] sm:$0xff]
        %v386 = vld [vmem:[%s253 + $0x170] sm:$0xff]
        %v387 = vld [vmem:[%s253 + $0x178] sm:$0xff]
        %v388 = vld [vmem:[%s253 + $0x180] sm:$0xff]
        %v389 = vld [vmem:[%s253 + $0x188] sm:$0xff]
        %v390 = vld [vmem:[%s253 + $0x190] sm:$0xff]
        %v391 = vld [vmem:[%s253 + $0x198] sm:$0xff]
        %v392 = vld [vmem:[%s253 + $0x1a0] sm:$0xff]
        %v393 = vld [vmem:[%s253 + $0x1a8] sm:$0xff]
        %v394 = vld [vmem:[%s253 + $0x1b0] sm:$0xff]
        %v395 = vld [vmem:[%s253 + $0x1b8] sm:$0xff]
        %v396 = vld [vmem:[%s253 + $0x1c0] sm:$0xff]
        %v397 = vld [vmem:[%s253 + $0x1c8] sm:$0xff]
        %v398 = vld [vmem:[%s253 + $0x1d0] sm:$0xff]
        %v399 = vld [vmem:[%s253 + $0x1d8] sm:$0xff]
        %v400 = vld [vmem:[%s253 + $0x1e0] sm:$0xff]
        %v401 = vld [vmem:[%s253 + $0x1e8] sm:$0xff]
        %v402 = vld [vmem:[%s253 + $0x1f0] sm:$0xff]
        %v403 = vld [vmem:[%s253 + $0x1f8] sm:$0xff]
        %v404 = vld [vmem:[%s253 + $0x200] sm:$0xff]
        %v405 = vld [vmem:[%s253 + $0x208] sm:$0xff]
        %v406 = vld [vmem:[%s253 + $0x210] sm:$0xff]
        %v407 = vld [vmem:[%s253 + $0x218] sm:$0xff]
        %v408 = vld [vmem:[%s253 + $0x220] sm:$0xff]
        %v409 = vld [vmem:[%s253 + $0x228] sm:$0xff]
        %v410 = vld [vmem:[%s253 + $0x230] sm:$0xff]
        %v411 = vld [vmem:[%s253 + $0x238] sm:$0xff]
        %v412 = vld [vmem:[%s253 + $0x240] sm:$0xff]
        %v413 = vld [vmem:[%s253 + $0x248] sm:$0xff]
        %v414 = vld [vmem:[%s253 + $0x250] sm:$0xff]
        %v415 = vld [vmem:[%s253 + $0x258] sm:$0xff]
        %v416 = vld [vmem:[%s253 + $0x260] sm:$0xff]
        %v417 = vld [vmem:[%s253 + $0x268] sm:$0xff]
        %v418 = vld [vmem:[%s253 + $0x270] sm:$0xff]
        %v419 = vld [vmem:[%s253 + $0x278] sm:$0xff]
        %v420 = vld [vmem:[%s253 + $0x280] sm:$0xff]
        %v421 = vld [vmem:[%s253 + $0x288] sm:$0xff]
        %v422 = vld [vmem:[%s253 + $0x290] sm:$0xff]
        %v423 = vld [vmem:[%s253 + $0x298] sm:$0xff]
        %v424 = vld [vmem:[%s253 + $0x2a0] sm:$0xff]
        %v425 = vld [vmem:[%s253 + $0x2a8] sm:$0xff]
        %v426 = vld [vmem:[%s253 + $0x2b0] sm:$0xff]
        %v427 = vld [vmem:[%s253 + $0x2b8] sm:$0xff]
        %v428 = vld [vmem:[%s253 + $0x2c0] sm:$0xff]
        %v429 = vld [vmem:[%s253 + $0x2c8] sm:$0xff]
        %v430 = vld [vmem:[%s253 + $0x2d0] sm:$0xff]
        %v431 = vld [vmem:[%s253 + $0x2d8] sm:$0xff]
        %v432 = vld [vmem:[%s253 + $0x2e0] sm:$0xff]
        %v433 = vld [vmem:[%s253 + $0x2e8] sm:$0xff]
        %v434 = vld [vmem:[%s253 + $0x2f0] sm:$0xff]
        %v435 = vld [vmem:[%s253 + $0x2f8] sm:$0xff]
        %v436 = vld [vmem:[%s253 + $0x300] sm:$0xff]
        %v437 = vld [vmem:[%s253 + $0x308] sm:$0xff]
        %v438 = vld [vmem:[%s253 + $0x310] sm:$0xff]
        %v439 = vld [vmem:[%s253 + $0x318] sm:$0xff]
        %v440 = vld [vmem:[%s253 + $0x320] sm:$0xff]
        %v441 = vld [vmem:[%s253 + $0x328] sm:$0xff]
        %v442 = vld [vmem:[%s253 + $0x330] sm:$0xff]
        %v443 = vld [vmem:[%s253 + $0x338] sm:$0xff]
        %v444 = vld [vmem:[%s253 + $0x340] sm:$0xff]
        %v445 = vld [vmem:[%s253 + $0x348] sm:$0xff]
        %v446 = vld [vmem:[%s253 + $0x350] sm:$0xff]
        %v447 = vld [vmem:[%s253 + $0x358] sm:$0xff]
        %v448 = vld [vmem:[%s253 + $0x360] sm:$0xff]
        %v449 = vld [vmem:[%s253 + $0x368] sm:$0xff]
        %v450 = vld [vmem:[%s253 + $0x370] sm:$0xff]
        %v451 = vld [vmem:[%s253 + $0x378] sm:$0xff]
        %v452 = vld [vmem:[%s253 + $0x380] sm:$0xff]
        %v453 = vld [vmem:[%s253 + $0x388] sm:$0xff]
        %v454 = vld [vmem:[%s253 + $0x390] sm:$0xff]
        %v455 = vld [vmem:[%s253 + $0x398] sm:$0xff]
        %v456 = vld [vmem:[%s253 + $0x3a0] sm:$0xff]
        %v457 = vld [vmem:[%s253 + $0x3a8] sm:$0xff]
        %v458 = vld [vmem:[%s253 + $0x3b0] sm:$0xff]
        %v459 = vld [vmem:[%s253 + $0x3b8] sm:$0xff]
        %v460 = vld [vmem:[%s253 + $0x3c0] sm:$0xff]
        %v461 = vld [vmem:[%s253 + $0x3c8] sm:$0xff]
        %v462 = vld [vmem:[%s253 + $0x3d0] sm:$0xff]
        %v463 = vld [vmem:[%s253 + $0x3d8] sm:$0xff]
        %v464 = vld [vmem:[%s253 + $0x3e0] sm:$0xff]
        %v465 = vld [vmem:[%s253 + $0x3e8] sm:$0xff]
        %v466 = vld [vmem:[%s253 + $0x3f0] sm:$0xff]
        %v467 = vld [vmem:[%s253 + $0x3f8] sm:$0xff]
        %v468 = vld [vmem:[%s253 + $0x400] sm:$0xff]
        %v469 = vld [vmem:[%s253 + $0x408] sm:$0xff]
        %v470 = vld [vmem:[%s253 + $0x410] sm:$0xff]
        %v471 = vld [vmem:[%s253 + $0x418] sm:$0xff]
        %v472 = vld [vmem:[%s253 + $0x420] sm:$0xff]
        %v473 = vld [vmem:[%s253 + $0x428] sm:$0xff]
        %v474 = vld [vmem:[%s253 + $0x430] sm:$0xff]
        %v475 = vld [vmem:[%s253 + $0x438] sm:$0xff]
        %v476 = vld [vmem:[%s253 + $0x440] sm:$0xff]
        %v477 = vld [vmem:[%s253 + $0x448] sm:$0xff]
        %v478 = vld [vmem:[%s253 + $0x450] sm:$0xff]
        %v479 = vld [vmem:[%s253 + $0x458] sm:$0xff]
        %v480 = vld [vmem:[%s253 + $0x460] sm:$0xff]
        %v481 = vld [vmem:[%s253 + $0x468] sm:$0xff]
        %v482 = vld [vmem:[%s253 + $0x470] sm:$0xff]
        %v483 = vld [vmem:[%s253 + $0x478] sm:$0xff]
        %v484 = vld [vmem:[%s253 + $0x480] sm:$0xff]
        %v485 = vld [vmem:[%s253 + $0x488] sm:$0xff]
        %v486 = vld [vmem:[%s253 + $0x490] sm:$0xff]
        %v487 = vld [vmem:[%s253 + $0x498] sm:$0xff]
        %v488 = vld [vmem:[%s253 + $0x4a0] sm:$0xff]
        %v489 = vld [vmem:[%s253 + $0x4a8] sm:$0xff]
        %v490 = vld [vmem:[%s253 + $0x4b0] sm:$0xff]
        %v491 = vld [vmem:[%s253 + $0x4b8] sm:$0xff]
        %v492 = vld [vmem:[%s253 + $0x4c0] sm:$0xff]
        %v493 = vld [vmem:[%s253 + $0x4c8] sm:$0xff]
        %v494 = vld [vmem:[%s253 + $0x4d0] sm:$0xff]
        %v495 = vld [vmem:[%s253 + $0x4d8] sm:$0xff]
        %v496 = vld [vmem:[%s253 + $0x4e0] sm:$0xff]
        %v497 = vld [vmem:[%s253 + $0x4e8] sm:$0xff]
        %v498 = vld [vmem:[%s253 + $0x4f0] sm:$0xff]
        %v499 = vld [vmem:[%s253 + $0x4f8] sm:$0xff]
        %v500 = vld [vmem:[%s253 + $0x500] sm:$0xff]
        %v501 = vld [vmem:[%s253 + $0x508] sm:$0xff]
        %v502 = vld [vmem:[%s253 + $0x510] sm:$0xff]
        %v503 = vld [vmem:[%s253 + $0x518] sm:$0xff]
        %v504 = vld [vmem:[%s253 + $0x520] sm:$0xff]
        %v505 = vld [vmem:[%s253 + $0x528] sm:$0xff]
        %v506 = vld [vmem:[%s253 + $0x530] sm:$0xff]
        %v507 = vld [vmem:[%s253 + $0x538] sm:$0xff]
        %v508 = vld [vmem:[%s253 + $0x540] sm:$0xff]
        %v509 = vld [vmem:[%s253 + $0x548] sm:$0xff]
        %v510 = vld [vmem:[%s253 + $0x550] sm:$0xff]
        %v511 = vld [vmem:[%s253 + $0x558] sm:$0xff]
        %v512 = vld [vmem:[%s253 + $0x560] sm:$0xff]
        %v513 = vld [vmem:[%s253 + $0x568] sm:$0xff]
        %v514 = vld [vmem:[%s253 + $0x570] sm:$0xff]
        %v515 = vld [vmem:[%s253 + $0x578] sm:$0xff]
        %v516 = vld [vmem:[%s253 + $0x580] sm:$0xff]
        %v517 = vld [vmem:[%s253 + $0x588] sm:$0xff]
        %v518 = vld [vmem:[%s253 + $0x590] sm:$0xff]
        %v519 = vld [vmem:[%s253 + $0x598] sm:$0xff]
        %v520 = vld [vmem:[%s253 + $0x5a0] sm:$0xff]
        %v521 = vld [vmem:[%s253 + $0x5a8] sm:$0xff]
        %v522 = vld [vmem:[%s253 + $0x5b0] sm:$0xff]
        %v523 = vld [vmem:[%s253 + $0x5b8] sm:$0xff]
        %v524 = vld [vmem:[%s253 + $0x5c0] sm:$0xff]
        %v525 = vld [vmem:[%s253 + $0x5c8] sm:$0xff]
        %v526 = vld [vmem:[%s253 + $0x5d0] sm:$0xff]
        %v527 = vld [vmem:[%s253 + $0x5d8] sm:$0xff]
        %v528 = vld [vmem:[%s253 + $0x5e0] sm:$0xff]
        %v529 = vld [vmem:[%s253 + $0x5e8] sm:$0xff]
        %v530 = vld [vmem:[%s253 + $0x5f0] sm:$0xff]
        %v531 = vld [vmem:[%s253 + $0x5f8] sm:$0xff]
        %v532 = vld [vmem:[%s253 + $0x600] sm:$0xff]
        %v533 = vld [vmem:[%s253 + $0x608] sm:$0xff]
        %v534 = vld [vmem:[%s253 + $0x610] sm:$0xff]
        %v535 = vld [vmem:[%s253 + $0x618] sm:$0xff]
        %v536 = vld [vmem:[%s253 + $0x620] sm:$0xff]
        %v537 = vld [vmem:[%s253 + $0x628] sm:$0xff]
        %v538 = vld [vmem:[%s253 + $0x630] sm:$0xff]
        %v539 = vld [vmem:[%s253 + $0x638] sm:$0xff]
        %v540 = vld [vmem:[%s253 + $0x640] sm:$0xff]
        %v541 = vld [vmem:[%s253 + $0x648] sm:$0xff]
        %v542 = vld [vmem:[%s253 + $0x650] sm:$0xff]
        %v543 = vld [vmem:[%s253 + $0x658] sm:$0xff]
        %v544 = vld [vmem:[%s253 + $0x660] sm:$0xff]
        %v545 = vld [vmem:[%s253 + $0x668] sm:$0xff]
        %v546 = vld [vmem:[%s253 + $0x670] sm:$0xff]
        %v547 = vld [vmem:[%s253 + $0x678] sm:$0xff]
        %v548 = vld [vmem:[%s253 + $0x680] sm:$0xff]
        %v549 = vld [vmem:[%s253 + $0x688] sm:$0xff]
        %v550 = vld [vmem:[%s253 + $0x690] sm:$0xff]
        %v551 = vld [vmem:[%s253 + $0x698] sm:$0xff]
        %v552 = vld [vmem:[%s253 + $0x6a0] sm:$0xff]
        %v553 = vld [vmem:[%s253 + $0x6a8] sm:$0xff]
        %v554 = vld [vmem:[%s253 + $0x6b0] sm:$0xff]
        %v555 = vld [vmem:[%s253 + $0x6b8] sm:$0xff]
        %v556 = vld [vmem:[%s253 + $0x6c0] sm:$0xff]
        %v557 = vld [vmem:[%s253 + $0x6c8] sm:$0xff]
        %v558 = vld [vmem:[%s253 + $0x6d0] sm:$0xff]
        %v559 = vld [vmem:[%s253 + $0x6d8] sm:$0xff]
        %v560 = vld [vmem:[%s253 + $0x6e0] sm:$0xff]
        %v561 = vld [vmem:[%s253 + $0x6e8] sm:$0xff]
        %v562 = vld [vmem:[%s253 + $0x6f0] sm:$0xff]
        %v563 = vld [vmem:[%s253 + $0x6f8] sm:$0xff]
        %v564 = vld [vmem:[%s253 + $0x700] sm:$0xff]
        %v565 = vld [vmem:[%s253 + $0x708] sm:$0xff]
        %v566 = vld [vmem:[%s253 + $0x710] sm:$0xff]
        %v567 = vld [vmem:[%s253 + $0x718] sm:$0xff]
        %v568 = vld [vmem:[%s253 + $0x720] sm:$0xff]
        %v569 = vld [vmem:[%s253 + $0x728] sm:$0xff]
        %v570 = vld [vmem:[%s253 + $0x730] sm:$0xff]
        %v571 = vld [vmem:[%s253 + $0x738] sm:$0xff]
        %v572 = vld [vmem:[%s253 + $0x740] sm:$0xff]
        %v573 = vld [vmem:[%s253 + $0x748] sm:$0xff]
        %v574 = vld [vmem:[%s253 + $0x750] sm:$0xff]
        %v575 = vld [vmem:[%s253 + $0x758] sm:$0xff]
        %v576 = vld [vmem:[%s253 + $0x760] sm:$0xff]
        %v577 = vld [vmem:[%s253 + $0x768] sm:$0xff]
        %v578 = vld [vmem:[%s253 + $0x770] sm:$0xff]
        %v579 = vld [vmem:[%s253 + $0x778] sm:$0xff]
        %v580 = vld [vmem:[%s253 + $0x780] sm:$0xff]
        %v581 = vld [vmem:[%s253 + $0x788] sm:$0xff]
        %v582 = vld [vmem:[%s253 + $0x790] sm:$0xff]
        %v583 = vld [vmem:[%s253 + $0x798] sm:$0xff]
        %v584 = vld [vmem:[%s253 + $0x7a0] sm:$0xff]
        %v585 = vld [vmem:[%s253 + $0x7a8] sm:$0xff]
        %v586 = vld [vmem:[%s253 + $0x7b0] sm:$0xff]
        %v587 = vld [vmem:[%s253 + $0x7b8] sm:$0xff]
        %v588 = vld [vmem:[%s253 + $0x7c0] sm:$0xff]
        %v589 = vld [vmem:[%s253 + $0x7c8] sm:$0xff]
        %v590 = vld [vmem:[%s253 + $0x7d0] sm:$0xff]
        %v591 = vld [vmem:[%s253 + $0x7d8] sm:$0xff]
        %v592 = vld [vmem:[%s253 + $0x7e0] sm:$0xff]
        %v593 = vld [vmem:[%s253 + $0x7e8] sm:$0xff]
        %v594 = vld [vmem:[%s253 + $0x7f0] sm:$0xff]
        %v595 = vld [vmem:[%s253 + $0x7f8] sm:$0xff]
        %v596 = vld [vmem:[%s253 + $0x800] sm:$0xff]
        %v597 = vld [vmem:[%s253 + $0x808] sm:$0xff]
        %v598 = vld [vmem:[%s253 + $0x810] sm:$0xff]
        %v599 = vld [vmem:[%s253 + $0x818] sm:$0xff]
        %v600 = vld [vmem:[%s253 + $0x820] sm:$0xff]
        %v601 = vld [vmem:[%s253 + $0x828] sm:$0xff]
        %v602 = vld [vmem:[%s253 + $0x830] sm:$0xff]
        %v603 = vld [vmem:[%s253 + $0x838] sm:$0xff]
        %v604 = vld [vmem:[%s253 + $0x840] sm:$0xff]
        %v605 = vld [vmem:[%s253 + $0x848] sm:$0xff]
        %v606 = vld [vmem:[%s253 + $0x850] sm:$0xff]
        %v607 = vld [vmem:[%s253 + $0x858] sm:$0xff]
        %v608 = vld [vmem:[%s253 + $0x860] sm:$0xff]
        %v609 = vld [vmem:[%s253 + $0x868] sm:$0xff]
        %v610 = vld [vmem:[%s253 + $0x870] sm:$0xff]
        %v611 = vld [vmem:[%s253 + $0x878] sm:$0xff]
        %v612 = vld [vmem:[%s253 + $0x880] sm:$0xff]
        %v613 = vld [vmem:[%s253 + $0x888] sm:$0xff]
        %v614 = vld [vmem:[%s253 + $0x890] sm:$0xff]
        %v615 = vld [vmem:[%s253 + $0x898] sm:$0xff]
        %v616 = vld [vmem:[%s253 + $0x8a0] sm:$0xff]
        %v617 = vld [vmem:[%s253 + $0x8a8] sm:$0xff]
        %v618 = vld [vmem:[%s253 + $0x8b0] sm:$0xff]
        %v619 = vld [vmem:[%s253 + $0x8b8] sm:$0xff]
        %v620 = vld [vmem:[%s253 + $0x8c0] sm:$0xff]
        %v621 = vld [vmem:[%s253 + $0x8c8] sm:$0xff]
        %v622 = vld [vmem:[%s253 + $0x8d0] sm:$0xff]
        %v623 = vld [vmem:[%s253 + $0x8d8] sm:$0xff]
        %v624 = vld [vmem:[%s253 + $0x8e0] sm:$0xff]
        %v625 = vld [vmem:[%s253 + $0x8e8] sm:$0xff]
        %v626 = vld [vmem:[%s253 + $0x8f0] sm:$0xff]
        %v627 = vld [vmem:[%s253 + $0x8f8] sm:$0xff]
        %v628 = vld [vmem:[%s253 + $0x900] sm:$0xff]
        %v629 = vld [vmem:[%s253 + $0x908] sm:$0xff]
        %v630 = vld [vmem:[%s253 + $0x910] sm:$0xff]
        %v631 = vld [vmem:[%s253 + $0x918] sm:$0xff]
        %v632 = vld [vmem:[%s253 + $0x920] sm:$0xff]
        %v633 = vld [vmem:[%s253 + $0x928] sm:$0xff]
        %v634 = vld [vmem:[%s253 + $0x930] sm:$0xff]
        %v635 = vld [vmem:[%s253 + $0x938] sm:$0xff]
        %v636 = vld [vmem:[%s253 + $0x940] sm:$0xff]
        %v637 = vld [vmem:[%s253 + $0x948] sm:$0xff]
        %v638 = vld [vmem:[%s253 + $0x950] sm:$0xff]
        %v639 = vld [vmem:[%s253 + $0x958] sm:$0xff]
        %v640 = vld [vmem:[%s253 + $0x960] sm:$0xff]
        %v641 = vld [vmem:[%s253 + $0x968] sm:$0xff]
        %v642 = vld [vmem:[%s253 + $0x970] sm:$0xff]
        %v643 = vld [vmem:[%s253 + $0x978] sm:$0xff]
        %v644 = vld [vmem:[%s253 + $0x980] sm:$0xff]
        %v645 = vld [vmem:[%s253 + $0x988] sm:$0xff]
        %v646 = vld [vmem:[%s253 + $0x990] sm:$0xff]
        %v647 = vld [vmem:[%s253 + $0x998] sm:$0xff]
        %v648 = vld [vmem:[%s253 + $0x9a0] sm:$0xff]
        %v649 = vld [vmem:[%s253 + $0x9a8] sm:$0xff]
        %v650 = vld [vmem:[%s253 + $0x9b0] sm:$0xff]
        %v651 = vld [vmem:[%s253 + $0x9b8] sm:$0xff]
        %v652 = vld [vmem:[%s253 + $0x9c0] sm:$0xff]
        %v653 = vld [vmem:[%s253 + $0x9c8] sm:$0xff]
        %v654 = vld [vmem:[%s253 + $0x9d0] sm:$0xff]
        %v655 = vld [vmem:[%s253 + $0x9d8] sm:$0xff]
        %v656 = vld [vmem:[%s253 + $0x9e0] sm:$0xff]
        %v657 = vld [vmem:[%s253 + $0x9e8] sm:$0xff]
        %v658 = vld [vmem:[%s253 + $0x9f0] sm:$0xff]
        %v659 = vld [vmem:[%s253 + $0x9f8] sm:$0xff]
        %v660 = vld [vmem:[%s253 + $0xa00] sm:$0xff]
        %v661 = vld [vmem:[%s253 + $0xa08] sm:$0xff]
        %v662 = vld [vmem:[%s253 + $0xa10] sm:$0xff]
        %v663 = vld [vmem:[%s253 + $0xa18] sm:$0xff]
        %v664 = vld [vmem:[%s253 + $0xa20] sm:$0xff]
        %v665 = vld [vmem:[%s253 + $0xa28] sm:$0xff]
        %v666 = vld [vmem:[%s253 + $0xa30] sm:$0xff]
        %v667 = vld [vmem:[%s253 + $0xa38] sm:$0xff]
        %v668 = vld [vmem:[%s253 + $0xa40] sm:$0xff]
        %v669 = vld [vmem:[%s253 + $0xa48] sm:$0xff]
        %v670 = vld [vmem:[%s253 + $0xa50] sm:$0xff]
        %v671 = vld [vmem:[%s253 + $0xa58] sm:$0xff]
        %v672 = vld [vmem:[%s253 + $0xa60] sm:$0xff]
        %v673 = vld [vmem:[%s253 + $0xa68] sm:$0xff]
        %v674 = vld [vmem:[%s253 + $0xa70] sm:$0xff]
        %v675 = vld [vmem:[%s253 + $0xa78] sm:$0xff]
        %v676 = vld [vmem:[%s253 + $0xa80] sm:$0xff]
        %v677 = vld [vmem:[%s253 + $0xa88] sm:$0xff]
        %v678 = vld [vmem:[%s253 + $0xa90] sm:$0xff]
        %v679 = vld [vmem:[%s253 + $0xa98] sm:$0xff]
        %v680 = vld [vmem:[%s253 + $0xaa0] sm:$0xff]
        %v681 = vld [vmem:[%s253 + $0xaa8] sm:$0xff]
        %v682 = vld [vmem:[%s253 + $0xab0] sm:$0xff]
        %v683 = vld [vmem:[%s253 + $0xab8] sm:$0xff]
        %v684 = vld [vmem:[%s253 + $0xac0] sm:$0xff]
        %v685 = vld [vmem:[%s253 + $0xac8] sm:$0xff]
        %v686 = vld [vmem:[%s253 + $0xad0] sm:$0xff]
        %v687 = vld [vmem:[%s253 + $0xad8] sm:$0xff]
        %v688 = vld [vmem:[%s253 + $0xae0] sm:$0xff]
        %v689 = vld [vmem:[%s253 + $0xae8] sm:$0xff]
        %v690 = vld [vmem:[%s253 + $0xaf0] sm:$0xff]
        %v691 = vld [vmem:[%s253 + $0xaf8] sm:$0xff]
        %v692 = vld [vmem:[%s253 + $0xb00] sm:$0xff]
        %v693 = vld [vmem:[%s253 + $0xb08] sm:$0xff]
        %v694 = vld [vmem:[%s253 + $0xb10] sm:$0xff]
        %v695 = vld [vmem:[%s253 + $0xb18] sm:$0xff]
        %v696 = vld [vmem:[%s253 + $0xb20] sm:$0xff]
        %v697 = vld [vmem:[%s253 + $0xb28] sm:$0xff]
        %v698 = vld [vmem:[%s253 + $0xb30] sm:$0xff]
        %v699 = vld [vmem:[%s253 + $0xb38] sm:$0xff]
        %v700 = vld [vmem:[%s253 + $0xb40] sm:$0xff]
        %v701 = vld [vmem:[%s253 + $0xb48] sm:$0xff]
        %v702 = vld [vmem:[%s253 + $0xb50] sm:$0xff]
        %v703 = vld [vmem:[%s253 + $0xb58] sm:$0xff]
        %v704 = vld [vmem:[%s253 + $0xb60] sm:$0xff]
        %v705 = vld [vmem:[%s253 + $0xb68] sm:$0xff]
        %v706 = vld [vmem:[%s253 + $0xb70] sm:$0xff]
        %v707 = vld [vmem:[%s253 + $0xb78] sm:$0xff]
        %v708 = vld [vmem:[%s253 + $0xb80] sm:$0xff]
        %v709 = vld [vmem:[%s253 + $0xb88] sm:$0xff]
        %v710 = vld [vmem:[%s253 + $0xb90] sm:$0xff]
        %v711 = vld [vmem:[%s253 + $0xb98] sm:$0xff]
        %v712 = vld [vmem:[%s253 + $0xba0] sm:$0xff]
        %v713 = vld [vmem:[%s253 + $0xba8] sm:$0xff]
        %v714 = vld [vmem:[%s253 + $0xbb0] sm:$0xff]
        %v715 = vld [vmem:[%s253 + $0xbb8] sm:$0xff]
        %v716 = vld [vmem:[%s253 + $0xbc0] sm:$0xff]
        %v717 = vld [vmem:[%s253 + $0xbc8] sm:$0xff]
        %v718 = vld [vmem:[%s253 + $0xbd0] sm:$0xff]
        %v719 = vld [vmem:[%s253 + $0xbd8] sm:$0xff]
        %v720 = vld [vmem:[%s253 + $0xbe0] sm:$0xff]
        %v721 = vld [vmem:[%s253 + $0xbe8] sm:$0xff]
        %v722 = vld [vmem:[%s253 + $0xbf0] sm:$0xff]
        %v723 = vld [vmem:[%s253 + $0xbf8] sm:$0xff]
        %v748 = vunpack.c.l.b16 %v312
        %v749 = vunpack.c.h.b16 %v312
        %v750 = vunpack.c.l.b16 %v313
        %v751 = vunpack.c.h.b16 %v313
        %v752 = vunpack.c.l.b16 %v314
        %v753 = vunpack.c.h.b16 %v314
        %v754 = vunpack.c.l.b16 %v315
        %v755 = vunpack.c.h.b16 %v315
        %v756 = vunpack.c.l.b16 %v316
        %v757 = vunpack.c.h.b16 %v316
        %v758 = vunpack.c.l.b16 %v317
        %v759 = vunpack.c.h.b16 %v317
        %v760 = vunpack.c.l.b16 %v318
        %v761 = vunpack.c.h.b16 %v318
        %v762 = vunpack.c.l.b16 %v319
        %v763 = vunpack.c.h.b16 %v319
        %v764 = vunpack.c.l.b16 %v320
        %v765 = vunpack.c.h.b16 %v320
        %v766 = vunpack.c.l.b16 %v321
        %v767 = vunpack.c.h.b16 %v321
        %v768 = vunpack.c.l.b16 %v322
        %v769 = vunpack.c.h.b16 %v322
        %v770 = vunpack.c.l.b16 %v323
        %v771 = vunpack.c.h.b16 %v323
        %v772 = vunpack.c.l.b16 %v324
        %v773 = vunpack.c.h.b16 %v324
        %v774 = vunpack.c.l.b16 %v325
        %v775 = vunpack.c.h.b16 %v325
        %v776 = vunpack.c.l.b16 %v326
        %v777 = vunpack.c.h.b16 %v326
        %v778 = vunpack.c.l.b16 %v327
        %v779 = vunpack.c.h.b16 %v327
        %v780 = vunpack.c.l.b16 %v328
        %v781 = vunpack.c.h.b16 %v328
        %v782 = vunpack.c.l.b16 %v329
        %v783 = vunpack.c.h.b16 %v329
        %v784 = vunpack.c.l.b16 %v330
        %v785 = vunpack.c.h.b16 %v330
        %v786 = vunpack.c.l.b16 %v331
        %v787 = vunpack.c.h.b16 %v331
        %v788 = vunpack.c.l.b16 %v332
        %v789 = vunpack.c.h.b16 %v332
        %v790 = vunpack.c.l.b16 %v333
        %v791 = vunpack.c.h.b16 %v333
        %v792 = vunpack.c.l.b16 %v334
        %v793 = vunpack.c.h.b16 %v334
        %v794 = vunpack.c.l.b16 %v335
        %v795 = vunpack.c.h.b16 %v335
        %v796 = vpack.c.b16 %v772, %v748
        %v797 = vpack.c.b16 %v773, %v749
        %v798 = vpack.c.b16 %v774, %v750
        %v799 = vpack.c.b16 %v775, %v751
        %v800 = vpack.c.b16 %v776, %v752
        %v801 = vpack.c.b16 %v777, %v753
        %v802 = vpack.c.b16 %v778, %v754
        %v803 = vpack.c.b16 %v779, %v755
        %v804 = vpack.c.b16 %v780, %v756
        %v805 = vpack.c.b16 %v781, %v757
        %v806 = vpack.c.b16 %v782, %v758
        %v807 = vpack.c.b16 %v783, %v759
        %v808 = vpack.c.b16 %v784, %v760
        %v809 = vpack.c.b16 %v785, %v761
        %v810 = vpack.c.b16 %v786, %v762
        %v811 = vpack.c.b16 %v787, %v763
        %v812 = vpack.c.b16 %v788, %v764
        %v813 = vpack.c.b16 %v789, %v765
        %v814 = vpack.c.b16 %v790, %v766
        %v815 = vpack.c.b16 %v791, %v767
        %v816 = vpack.c.b16 %v792, %v768
        %v817 = vpack.c.b16 %v793, %v769
        %v818 = vpack.c.b16 %v794, %v770
        %v819 = vpack.c.b16 %v795, %v771
        %v1228 = vunpack.c.l.b16 %v340
        %v1229 = vunpack.c.h.b16 %v340
        %v1230 = vunpack.c.l.b16 %v341
        %v1231 = vunpack.c.h.b16 %v341
        %v1232 = vunpack.c.l.b16 %v342
        %v1233 = vunpack.c.h.b16 %v342
        %v1234 = vunpack.c.l.b16 %v343
        %v1235 = vunpack.c.h.b16 %v343
        %v1236 = vunpack.c.l.b16 %v344
        %v1237 = vunpack.c.h.b16 %v344
        %v1238 = vunpack.c.l.b16 %v345
        %v1239 = vunpack.c.h.b16 %v345
        %v1240 = vunpack.c.l.b16 %v346
        %v1241 = vunpack.c.h.b16 %v346
        %v1242 = vunpack.c.l.b16 %v347
        %v1243 = vunpack.c.h.b16 %v347
        %v1244 = vunpack.c.l.b16 %v348
        %v1245 = vunpack.c.h.b16 %v348
        %v1246 = vunpack.c.l.b16 %v349
        %v1247 = vunpack.c.h.b16 %v349
        %v1248 = vunpack.c.l.b16 %v350
        %v1249 = vunpack.c.h.b16 %v350
        %v1250 = vunpack.c.l.b16 %v351
        %v1251 = vunpack.c.h.b16 %v351
        %v1252 = vunpack.c.l.b16 %v352
        %v1253 = vunpack.c.h.b16 %v352
        %v1254 = vunpack.c.l.b16 %v353
        %v1255 = vunpack.c.h.b16 %v353
        %v1256 = vunpack.c.l.b16 %v354
        %v1257 = vunpack.c.h.b16 %v354
        %v1258 = vunpack.c.l.b16 %v355
        %v1259 = vunpack.c.h.b16 %v355
        %v1260 = vunpack.c.l.b16 %v356
        %v1261 = vunpack.c.h.b16 %v356
        %v1262 = vunpack.c.l.b16 %v357
        %v1263 = vunpack.c.h.b16 %v357
        %v1264 = vunpack.c.l.b16 %v358
        %v1265 = vunpack.c.h.b16 %v358
        %v1266 = vunpack.c.l.b16 %v359
        %v1267 = vunpack.c.h.b16 %v359
        %v1268 = vunpack.c.l.b16 %v360
        %v1269 = vunpack.c.h.b16 %v360
        %v1270 = vunpack.c.l.b16 %v361
        %v1271 = vunpack.c.h.b16 %v361
        %v1272 = vunpack.c.l.b16 %v362
        %v1273 = vunpack.c.h.b16 %v362
        %v1274 = vunpack.c.l.b16 %v363
        %v1275 = vunpack.c.h.b16 %v363
        %v1276 = vunpack.c.l.b16 %v364
        %v1277 = vunpack.c.h.b16 %v364
        %v1278 = vunpack.c.l.b16 %v365
        %v1279 = vunpack.c.h.b16 %v365
        %v1280 = vunpack.c.l.b16 %v366
        %v1281 = vunpack.c.h.b16 %v366
        %v1282 = vunpack.c.l.b16 %v367
        %v1283 = vunpack.c.h.b16 %v367
        %v1284 = vunpack.c.l.b16 %v368
        %v1285 = vunpack.c.h.b16 %v368
        %v1286 = vunpack.c.l.b16 %v369
        %v1287 = vunpack.c.h.b16 %v369
        %v1288 = vunpack.c.l.b16 %v370
        %v1289 = vunpack.c.h.b16 %v370
        %v1290 = vunpack.c.l.b16 %v371
        %v1291 = vunpack.c.h.b16 %v371
        %v1292 = vunpack.c.l.b16 %v372
        %v1293 = vunpack.c.h.b16 %v372
        %v1294 = vunpack.c.l.b16 %v373
        %v1295 = vunpack.c.h.b16 %v373
        %v1296 = vunpack.c.l.b16 %v374
        %v1297 = vunpack.c.h.b16 %v374
        %v1298 = vunpack.c.l.b16 %v375
        %v1299 = vunpack.c.h.b16 %v375
        %v1300 = vunpack.c.l.b16 %v376
        %v1301 = vunpack.c.h.b16 %v376
        %v1302 = vunpack.c.l.b16 %v377
        %v1303 = vunpack.c.h.b16 %v377
        %v1304 = vunpack.c.l.b16 %v378
        %v1305 = vunpack.c.h.b16 %v378
        %v1306 = vunpack.c.l.b16 %v379
        %v1307 = vunpack.c.h.b16 %v379
        %v1308 = vunpack.c.l.b16 %v380
        %v1309 = vunpack.c.h.b16 %v380
        %v1310 = vunpack.c.l.b16 %v381
        %v1311 = vunpack.c.h.b16 %v381
        %v1312 = vunpack.c.l.b16 %v382
        %v1313 = vunpack.c.h.b16 %v382
        %v1314 = vunpack.c.l.b16 %v383
        %v1315 = vunpack.c.h.b16 %v383
        %v1316 = vunpack.c.l.b16 %v384
        %v1317 = vunpack.c.h.b16 %v384
        %v1318 = vunpack.c.l.b16 %v385
        %v1319 = vunpack.c.h.b16 %v385
        %v1320 = vunpack.c.l.b16 %v386
        %v1321 = vunpack.c.h.b16 %v386
        %v1322 = vunpack.c.l.b16 %v387
        %v1323 = vunpack.c.h.b16 %v387
        %v1324 = vunpack.c.l.b16 %v388
        %v1325 = vunpack.c.h.b16 %v388
        %v1326 = vunpack.c.l.b16 %v389
        %v1327 = vunpack.c.h.b16 %v389
        %v1328 = vunpack.c.l.b16 %v390
        %v1329 = vunpack.c.h.b16 %v390
        %v1330 = vunpack.c.l.b16 %v391
        %v1331 = vunpack.c.h.b16 %v391
        %v1332 = vunpack.c.l.b16 %v392
        %v1333 = vunpack.c.h.b16 %v392
        %v1334 = vunpack.c.l.b16 %v393
        %v1335 = vunpack.c.h.b16 %v393
        %v1336 = vunpack.c.l.b16 %v394
        %v1337 = vunpack.c.h.b16 %v394
        %v1338 = vunpack.c.l.b16 %v395
        %v1339 = vunpack.c.h.b16 %v395
        %v1340 = vunpack.c.l.b16 %v396
        %v1341 = vunpack.c.h.b16 %v396
        %v1342 = vunpack.c.l.b16 %v397
        %v1343 = vunpack.c.h.b16 %v397
        %v1344 = vunpack.c.l.b16 %v398
        %v1345 = vunpack.c.h.b16 %v398
        %v1346 = vunpack.c.l.b16 %v399
        %v1347 = vunpack.c.h.b16 %v399
        %v1348 = vunpack.c.l.b16 %v400
        %v1349 = vunpack.c.h.b16 %v400
        %v1350 = vunpack.c.l.b16 %v401
        %v1351 = vunpack.c.h.b16 %v401
        %v1352 = vunpack.c.l.b16 %v402
        %v1353 = vunpack.c.h.b16 %v402
        %v1354 = vunpack.c.l.b16 %v403
        %v1355 = vunpack.c.h.b16 %v403
        %v1356 = vunpack.c.l.b16 %v404
        %v1357 = vunpack.c.h.b16 %v404
        %v1358 = vunpack.c.l.b16 %v405
        %v1359 = vunpack.c.h.b16 %v405
        %v1360 = vunpack.c.l.b16 %v406
        %v1361 = vunpack.c.h.b16 %v406
        %v1362 = vunpack.c.l.b16 %v407
        %v1363 = vunpack.c.h.b16 %v407
        %v1364 = vunpack.c.l.b16 %v408
        %v1365 = vunpack.c.h.b16 %v408
        %v1366 = vunpack.c.l.b16 %v409
        %v1367 = vunpack.c.h.b16 %v409
        %v1368 = vunpack.c.l.b16 %v410
        %v1369 = vunpack.c.h.b16 %v410
        %v1370 = vunpack.c.l.b16 %v411
        %v1371 = vunpack.c.h.b16 %v411
        %v1372 = vunpack.c.l.b16 %v412
        %v1373 = vunpack.c.h.b16 %v412
        %v1374 = vunpack.c.l.b16 %v413
        %v1375 = vunpack.c.h.b16 %v413
        %v1376 = vunpack.c.l.b16 %v414
        %v1377 = vunpack.c.h.b16 %v414
        %v1378 = vunpack.c.l.b16 %v415
        %v1379 = vunpack.c.h.b16 %v415
        %v1380 = vunpack.c.l.b16 %v416
        %v1381 = vunpack.c.h.b16 %v416
        %v1382 = vunpack.c.l.b16 %v417
        %v1383 = vunpack.c.h.b16 %v417
        %v1384 = vunpack.c.l.b16 %v418
        %v1385 = vunpack.c.h.b16 %v418
        %v1386 = vunpack.c.l.b16 %v419
        %v1387 = vunpack.c.h.b16 %v419
        %v1388 = vunpack.c.l.b16 %v420
        %v1389 = vunpack.c.h.b16 %v420
        %v1390 = vunpack.c.l.b16 %v421
        %v1391 = vunpack.c.h.b16 %v421
        %v1392 = vunpack.c.l.b16 %v422
        %v1393 = vunpack.c.h.b16 %v422
        %v1394 = vunpack.c.l.b16 %v423
        %v1395 = vunpack.c.h.b16 %v423
        %v1396 = vunpack.c.l.b16 %v424
        %v1397 = vunpack.c.h.b16 %v424
        %v1398 = vunpack.c.l.b16 %v425
        %v1399 = vunpack.c.h.b16 %v425
        %v1400 = vunpack.c.l.b16 %v426
        %v1401 = vunpack.c.h.b16 %v426
        %v1402 = vunpack.c.l.b16 %v427
        %v1403 = vunpack.c.h.b16 %v427
        %v1404 = vunpack.c.l.b16 %v428
        %v1405 = vunpack.c.h.b16 %v428
        %v1406 = vunpack.c.l.b16 %v429
        %v1407 = vunpack.c.h.b16 %v429
        %v1408 = vunpack.c.l.b16 %v430
        %v1409 = vunpack.c.h.b16 %v430
        %v1410 = vunpack.c.l.b16 %v431
        %v1411 = vunpack.c.h.b16 %v431
        %v1412 = vunpack.c.l.b16 %v432
        %v1413 = vunpack.c.h.b16 %v432
        %v1414 = vunpack.c.l.b16 %v433
        %v1415 = vunpack.c.h.b16 %v433
        %v1416 = vunpack.c.l.b16 %v434
        %v1417 = vunpack.c.h.b16 %v434
        %v1418 = vunpack.c.l.b16 %v435
        %v1419 = vunpack.c.h.b16 %v435
        %v1420 = vunpack.c.l.b16 %v436
        %v1421 = vunpack.c.h.b16 %v436
        %v1422 = vunpack.c.l.b16 %v437
        %v1423 = vunpack.c.h.b16 %v437
        %v1424 = vunpack.c.l.b16 %v438
        %v1425 = vunpack.c.h.b16 %v438
        %v1426 = vunpack.c.l.b16 %v439
        %v1427 = vunpack.c.h.b16 %v439
        %v1428 = vunpack.c.l.b16 %v440
        %v1429 = vunpack.c.h.b16 %v440
        %v1430 = vunpack.c.l.b16 %v441
        %v1431 = vunpack.c.h.b16 %v441
        %v1432 = vunpack.c.l.b16 %v442
        %v1433 = vunpack.c.h.b16 %v442
        %v1434 = vunpack.c.l.b16 %v443
        %v1435 = vunpack.c.h.b16 %v443
        %v1436 = vunpack.c.l.b16 %v444
        %v1437 = vunpack.c.h.b16 %v444
        %v1438 = vunpack.c.l.b16 %v445
        %v1439 = vunpack.c.h.b16 %v445
        %v1440 = vunpack.c.l.b16 %v446
        %v1441 = vunpack.c.h.b16 %v446
        %v1442 = vunpack.c.l.b16 %v447
        %v1443 = vunpack.c.h.b16 %v447
        %v1444 = vunpack.c.l.b16 %v448
        %v1445 = vunpack.c.h.b16 %v448
        %v1446 = vunpack.c.l.b16 %v449
        %v1447 = vunpack.c.h.b16 %v449
        %v1448 = vunpack.c.l.b16 %v450
        %v1449 = vunpack.c.h.b16 %v450
        %v1450 = vunpack.c.l.b16 %v451
        %v1451 = vunpack.c.h.b16 %v451
        %v1452 = vunpack.c.l.b16 %v452
        %v1453 = vunpack.c.h.b16 %v452
        %v1454 = vunpack.c.l.b16 %v453
        %v1455 = vunpack.c.h.b16 %v453
        %v1456 = vunpack.c.l.b16 %v454
        %v1457 = vunpack.c.h.b16 %v454
        %v1458 = vunpack.c.l.b16 %v455
        %v1459 = vunpack.c.h.b16 %v455
        %v1460 = vunpack.c.l.b16 %v456
        %v1461 = vunpack.c.h.b16 %v456
        %v1462 = vunpack.c.l.b16 %v457
        %v1463 = vunpack.c.h.b16 %v457
        %v1464 = vunpack.c.l.b16 %v458
        %v1465 = vunpack.c.h.b16 %v458
        %v1466 = vunpack.c.l.b16 %v459
        %v1467 = vunpack.c.h.b16 %v459
        %v1468 = vunpack.c.l.b16 %v460
        %v1469 = vunpack.c.h.b16 %v460
        %v1470 = vunpack.c.l.b16 %v461
        %v1471 = vunpack.c.h.b16 %v461
        %v1472 = vunpack.c.l.b16 %v462
        %v1473 = vunpack.c.h.b16 %v462
        %v1474 = vunpack.c.l.b16 %v463
        %v1475 = vunpack.c.h.b16 %v463
        %v1476 = vunpack.c.l.b16 %v464
        %v1477 = vunpack.c.h.b16 %v464
        %v1478 = vunpack.c.l.b16 %v465
        %v1479 = vunpack.c.h.b16 %v465
        %v1480 = vunpack.c.l.b16 %v466
        %v1481 = vunpack.c.h.b16 %v466
        %v1482 = vunpack.c.l.b16 %v467
        %v1483 = vunpack.c.h.b16 %v467
        %v1484 = vunpack.c.l.b16 %v468
        %v1485 = vunpack.c.h.b16 %v468
        %v1486 = vunpack.c.l.b16 %v469
        %v1487 = vunpack.c.h.b16 %v469
        %v1488 = vunpack.c.l.b16 %v470
        %v1489 = vunpack.c.h.b16 %v470
        %v1490 = vunpack.c.l.b16 %v471
        %v1491 = vunpack.c.h.b16 %v471
        %v1492 = vunpack.c.l.b16 %v472
        %v1493 = vunpack.c.h.b16 %v472
        %v1494 = vunpack.c.l.b16 %v473
        %v1495 = vunpack.c.h.b16 %v473
        %v1496 = vunpack.c.l.b16 %v474
        %v1497 = vunpack.c.h.b16 %v474
        %v1498 = vunpack.c.l.b16 %v475
        %v1499 = vunpack.c.h.b16 %v475
        %v1500 = vunpack.c.l.b16 %v476
        %v1501 = vunpack.c.h.b16 %v476
        %v1502 = vunpack.c.l.b16 %v477
        %v1503 = vunpack.c.h.b16 %v477
        %v1504 = vunpack.c.l.b16 %v478
        %v1505 = vunpack.c.h.b16 %v478
        %v1506 = vunpack.c.l.b16 %v479
        %v1507 = vunpack.c.h.b16 %v479
        %v1508 = vunpack.c.l.b16 %v480
        %v1509 = vunpack.c.h.b16 %v480
        %v1510 = vunpack.c.l.b16 %v481
        %v1511 = vunpack.c.h.b16 %v481
        %v1512 = vunpack.c.l.b16 %v482
        %v1513 = vunpack.c.h.b16 %v482
        %v1514 = vunpack.c.l.b16 %v483
        %v1515 = vunpack.c.h.b16 %v483
        %v1516 = vunpack.c.l.b16 %v484
        %v1517 = vunpack.c.h.b16 %v484
        %v1518 = vunpack.c.l.b16 %v485
        %v1519 = vunpack.c.h.b16 %v485
        %v1520 = vunpack.c.l.b16 %v486
        %v1521 = vunpack.c.h.b16 %v486
        %v1522 = vunpack.c.l.b16 %v487
        %v1523 = vunpack.c.h.b16 %v487
        %v1524 = vunpack.c.l.b16 %v488
        %v1525 = vunpack.c.h.b16 %v488
        %v1526 = vunpack.c.l.b16 %v489
        %v1527 = vunpack.c.h.b16 %v489
        %v1528 = vunpack.c.l.b16 %v490
        %v1529 = vunpack.c.h.b16 %v490
        %v1530 = vunpack.c.l.b16 %v491
        %v1531 = vunpack.c.h.b16 %v491
        %v1532 = vunpack.c.l.b16 %v492
        %v1533 = vunpack.c.h.b16 %v492
        %v1534 = vunpack.c.l.b16 %v493
        %v1535 = vunpack.c.h.b16 %v493
        %v1536 = vunpack.c.l.b16 %v494
        %v1537 = vunpack.c.h.b16 %v494
        %v1538 = vunpack.c.l.b16 %v495
        %v1539 = vunpack.c.h.b16 %v495
        %v1540 = vunpack.c.l.b16 %v496
        %v1541 = vunpack.c.h.b16 %v496
        %v1542 = vunpack.c.l.b16 %v497
        %v1543 = vunpack.c.h.b16 %v497
        %v1544 = vunpack.c.l.b16 %v498
        %v1545 = vunpack.c.h.b16 %v498
        %v1546 = vunpack.c.l.b16 %v499
        %v1547 = vunpack.c.h.b16 %v499
        %v1548 = vunpack.c.l.b16 %v500
        %v1549 = vunpack.c.h.b16 %v500
        %v1550 = vunpack.c.l.b16 %v501
        %v1551 = vunpack.c.h.b16 %v501
        %v1552 = vunpack.c.l.b16 %v502
        %v1553 = vunpack.c.h.b16 %v502
        %v1554 = vunpack.c.l.b16 %v503
        %v1555 = vunpack.c.h.b16 %v503
        %v1556 = vunpack.c.l.b16 %v504
        %v1557 = vunpack.c.h.b16 %v504
        %v1558 = vunpack.c.l.b16 %v505
        %v1559 = vunpack.c.h.b16 %v505
        %v1560 = vunpack.c.l.b16 %v506
        %v1561 = vunpack.c.h.b16 %v506
        %v1562 = vunpack.c.l.b16 %v507
        %v1563 = vunpack.c.h.b16 %v507
        %v1564 = vunpack.c.l.b16 %v508
        %v1565 = vunpack.c.h.b16 %v508
        %v1566 = vunpack.c.l.b16 %v509
        %v1567 = vunpack.c.h.b16 %v509
        %v1568 = vunpack.c.l.b16 %v510
        %v1569 = vunpack.c.h.b16 %v510
        %v1570 = vunpack.c.l.b16 %v511
        %v1571 = vunpack.c.h.b16 %v511
        %v1572 = vunpack.c.l.b16 %v512
        %v1573 = vunpack.c.h.b16 %v512
        %v1574 = vunpack.c.l.b16 %v513
        %v1575 = vunpack.c.h.b16 %v513
        %v1576 = vunpack.c.l.b16 %v514
        %v1577 = vunpack.c.h.b16 %v514
        %v1578 = vunpack.c.l.b16 %v515
        %v1579 = vunpack.c.h.b16 %v515
        %v1580 = vunpack.c.l.b16 %v516
        %v1581 = vunpack.c.h.b16 %v516
        %v1582 = vunpack.c.l.b16 %v517
        %v1583 = vunpack.c.h.b16 %v517
        %v1584 = vunpack.c.l.b16 %v518
        %v1585 = vunpack.c.h.b16 %v518
        %v1586 = vunpack.c.l.b16 %v519
        %v1587 = vunpack.c.h.b16 %v519
        %v1588 = vunpack.c.l.b16 %v520
        %v1589 = vunpack.c.h.b16 %v520
        %v1590 = vunpack.c.l.b16 %v521
        %v1591 = vunpack.c.h.b16 %v521
        %v1592 = vunpack.c.l.b16 %v522
        %v1593 = vunpack.c.h.b16 %v522
        %v1594 = vunpack.c.l.b16 %v523
        %v1595 = vunpack.c.h.b16 %v523
        %v1596 = vunpack.c.l.b16 %v524
        %v1597 = vunpack.c.h.b16 %v524
        %v1598 = vunpack.c.l.b16 %v525
        %v1599 = vunpack.c.h.b16 %v525
        %v1600 = vunpack.c.l.b16 %v526
        %v1601 = vunpack.c.h.b16 %v526
        %v1602 = vunpack.c.l.b16 %v527
        %v1603 = vunpack.c.h.b16 %v527
        %v1604 = vunpack.c.l.b16 %v528
        %v1605 = vunpack.c.h.b16 %v528
        %v1606 = vunpack.c.l.b16 %v529
        %v1607 = vunpack.c.h.b16 %v529
        %v1608 = vunpack.c.l.b16 %v530
        %v1609 = vunpack.c.h.b16 %v530
        %v1610 = vunpack.c.l.b16 %v531
        %v1611 = vunpack.c.h.b16 %v531
        %v1612 = vunpack.c.l.b16 %v532
        %v1613 = vunpack.c.h.b16 %v532
        %v1614 = vunpack.c.l.b16 %v533
        %v1615 = vunpack.c.h.b16 %v533
        %v1616 = vunpack.c.l.b16 %v534
        %v1617 = vunpack.c.h.b16 %v534
        %v1618 = vunpack.c.l.b16 %v535
        %v1619 = vunpack.c.h.b16 %v535
        %v1620 = vunpack.c.l.b16 %v536
        %v1621 = vunpack.c.h.b16 %v536
        %v1622 = vunpack.c.l.b16 %v537
        %v1623 = vunpack.c.h.b16 %v537
        %v1624 = vunpack.c.l.b16 %v538
        %v1625 = vunpack.c.h.b16 %v538
        %v1626 = vunpack.c.l.b16 %v539
        %v1627 = vunpack.c.h.b16 %v539
        %v1628 = vunpack.c.l.b16 %v540
        %v1629 = vunpack.c.h.b16 %v540
        %v1630 = vunpack.c.l.b16 %v541
        %v1631 = vunpack.c.h.b16 %v541
        %v1632 = vunpack.c.l.b16 %v542
        %v1633 = vunpack.c.h.b16 %v542
        %v1634 = vunpack.c.l.b16 %v543
        %v1635 = vunpack.c.h.b16 %v543
        %v1636 = vunpack.c.l.b16 %v544
        %v1637 = vunpack.c.h.b16 %v544
        %v1638 = vunpack.c.l.b16 %v545
        %v1639 = vunpack.c.h.b16 %v545
        %v1640 = vunpack.c.l.b16 %v546
        %v1641 = vunpack.c.h.b16 %v546
        %v1642 = vunpack.c.l.b16 %v547
        %v1643 = vunpack.c.h.b16 %v547
        %v1644 = vunpack.c.l.b16 %v548
        %v1645 = vunpack.c.h.b16 %v548
        %v1646 = vunpack.c.l.b16 %v549
        %v1647 = vunpack.c.h.b16 %v549
        %v1648 = vunpack.c.l.b16 %v550
        %v1649 = vunpack.c.h.b16 %v550
        %v1650 = vunpack.c.l.b16 %v551
        %v1651 = vunpack.c.h.b16 %v551
        %v1652 = vunpack.c.l.b16 %v552
        %v1653 = vunpack.c.h.b16 %v552
        %v1654 = vunpack.c.l.b16 %v553
        %v1655 = vunpack.c.h.b16 %v553
        %v1656 = vunpack.c.l.b16 %v554
        %v1657 = vunpack.c.h.b16 %v554
        %v1658 = vunpack.c.l.b16 %v555
        %v1659 = vunpack.c.h.b16 %v555
        %v1660 = vunpack.c.l.b16 %v556
        %v1661 = vunpack.c.h.b16 %v556
        %v1662 = vunpack.c.l.b16 %v557
        %v1663 = vunpack.c.h.b16 %v557
        %v1664 = vunpack.c.l.b16 %v558
        %v1665 = vunpack.c.h.b16 %v558
        %v1666 = vunpack.c.l.b16 %v559
        %v1667 = vunpack.c.h.b16 %v559
        %v1668 = vunpack.c.l.b16 %v560
        %v1669 = vunpack.c.h.b16 %v560
        %v1670 = vunpack.c.l.b16 %v561
        %v1671 = vunpack.c.h.b16 %v561
        %v1672 = vunpack.c.l.b16 %v562
        %v1673 = vunpack.c.h.b16 %v562
        %v1674 = vunpack.c.l.b16 %v563
        %v1675 = vunpack.c.h.b16 %v563
        %v1676 = vunpack.c.l.b16 %v564
        %v1677 = vunpack.c.h.b16 %v564
        %v1678 = vunpack.c.l.b16 %v565
        %v1679 = vunpack.c.h.b16 %v565
        %v1680 = vunpack.c.l.b16 %v566
        %v1681 = vunpack.c.h.b16 %v566
        %v1682 = vunpack.c.l.b16 %v567
        %v1683 = vunpack.c.h.b16 %v567
        %v1684 = vunpack.c.l.b16 %v568
        %v1685 = vunpack.c.h.b16 %v568
        %v1686 = vunpack.c.l.b16 %v569
        %v1687 = vunpack.c.h.b16 %v569
        %v1688 = vunpack.c.l.b16 %v570
        %v1689 = vunpack.c.h.b16 %v570
        %v1690 = vunpack.c.l.b16 %v571
        %v1691 = vunpack.c.h.b16 %v571
        %v1692 = vunpack.c.l.b16 %v572
        %v1693 = vunpack.c.h.b16 %v572
        %v1694 = vunpack.c.l.b16 %v573
        %v1695 = vunpack.c.h.b16 %v573
        %v1696 = vunpack.c.l.b16 %v574
        %v1697 = vunpack.c.h.b16 %v574
        %v1698 = vunpack.c.l.b16 %v575
        %v1699 = vunpack.c.h.b16 %v575
        %v1700 = vunpack.c.l.b16 %v576
        %v1701 = vunpack.c.h.b16 %v576
        %v1702 = vunpack.c.l.b16 %v577
        %v1703 = vunpack.c.h.b16 %v577
        %v1704 = vunpack.c.l.b16 %v578
        %v1705 = vunpack.c.h.b16 %v578
        %v1706 = vunpack.c.l.b16 %v579
        %v1707 = vunpack.c.h.b16 %v579
        %v1708 = vunpack.c.l.b16 %v580
        %v1709 = vunpack.c.h.b16 %v580
        %v1710 = vunpack.c.l.b16 %v581
        %v1711 = vunpack.c.h.b16 %v581
        %v1712 = vunpack.c.l.b16 %v582
        %v1713 = vunpack.c.h.b16 %v582
        %v1714 = vunpack.c.l.b16 %v583
        %v1715 = vunpack.c.h.b16 %v583
        %v1716 = vunpack.c.l.b16 %v584
        %v1717 = vunpack.c.h.b16 %v584
        %v1718 = vunpack.c.l.b16 %v585
        %v1719 = vunpack.c.h.b16 %v585
        %v1720 = vunpack.c.l.b16 %v586
        %v1721 = vunpack.c.h.b16 %v586
        %v1722 = vunpack.c.l.b16 %v587
        %v1723 = vunpack.c.h.b16 %v587
        %v1724 = vunpack.c.l.b16 %v588
        %v1725 = vunpack.c.h.b16 %v588
        %v1726 = vunpack.c.l.b16 %v589
        %v1727 = vunpack.c.h.b16 %v589
        %v1728 = vunpack.c.l.b16 %v590
        %v1729 = vunpack.c.h.b16 %v590
        %v1730 = vunpack.c.l.b16 %v591
        %v1731 = vunpack.c.h.b16 %v591
        %v1732 = vunpack.c.l.b16 %v592
        %v1733 = vunpack.c.h.b16 %v592
        %v1734 = vunpack.c.l.b16 %v593
        %v1735 = vunpack.c.h.b16 %v593
        %v1736 = vunpack.c.l.b16 %v594
        %v1737 = vunpack.c.h.b16 %v594
        %v1738 = vunpack.c.l.b16 %v595
        %v1739 = vunpack.c.h.b16 %v595
        %v1740 = vunpack.c.l.b16 %v596
        %v1741 = vunpack.c.h.b16 %v596
        %v1742 = vunpack.c.l.b16 %v597
        %v1743 = vunpack.c.h.b16 %v597
        %v1744 = vunpack.c.l.b16 %v598
        %v1745 = vunpack.c.h.b16 %v598
        %v1746 = vunpack.c.l.b16 %v599
        %v1747 = vunpack.c.h.b16 %v599
        %v1748 = vunpack.c.l.b16 %v600
        %v1749 = vunpack.c.h.b16 %v600
        %v1750 = vunpack.c.l.b16 %v601
        %v1751 = vunpack.c.h.b16 %v601
        %v1752 = vunpack.c.l.b16 %v602
        %v1753 = vunpack.c.h.b16 %v602
        %v1754 = vunpack.c.l.b16 %v603
        %v1755 = vunpack.c.h.b16 %v603
        %v1756 = vunpack.c.l.b16 %v604
        %v1757 = vunpack.c.h.b16 %v604
        %v1758 = vunpack.c.l.b16 %v605
        %v1759 = vunpack.c.h.b16 %v605
        %v1760 = vunpack.c.l.b16 %v606
        %v1761 = vunpack.c.h.b16 %v606
        %v1762 = vunpack.c.l.b16 %v607
        %v1763 = vunpack.c.h.b16 %v607
        %v1764 = vunpack.c.l.b16 %v608
        %v1765 = vunpack.c.h.b16 %v608
        %v1766 = vunpack.c.l.b16 %v609
        %v1767 = vunpack.c.h.b16 %v609
        %v1768 = vunpack.c.l.b16 %v610
        %v1769 = vunpack.c.h.b16 %v610
        %v1770 = vunpack.c.l.b16 %v611
        %v1771 = vunpack.c.h.b16 %v611
        %v1772 = vunpack.c.l.b16 %v612
        %v1773 = vunpack.c.h.b16 %v612
        %v1774 = vunpack.c.l.b16 %v613
        %v1775 = vunpack.c.h.b16 %v613
        %v1776 = vunpack.c.l.b16 %v614
        %v1777 = vunpack.c.h.b16 %v614
        %v1778 = vunpack.c.l.b16 %v615
        %v1779 = vunpack.c.h.b16 %v615
        %v1780 = vunpack.c.l.b16 %v616
        %v1781 = vunpack.c.h.b16 %v616
        %v1782 = vunpack.c.l.b16 %v617
        %v1783 = vunpack.c.h.b16 %v617
        %v1784 = vunpack.c.l.b16 %v618
        %v1785 = vunpack.c.h.b16 %v618
        %v1786 = vunpack.c.l.b16 %v619
        %v1787 = vunpack.c.h.b16 %v619
        %v1788 = vunpack.c.l.b16 %v620
        %v1789 = vunpack.c.h.b16 %v620
        %v1790 = vunpack.c.l.b16 %v621
        %v1791 = vunpack.c.h.b16 %v621
        %v1792 = vunpack.c.l.b16 %v622
        %v1793 = vunpack.c.h.b16 %v622
        %v1794 = vunpack.c.l.b16 %v623
        %v1795 = vunpack.c.h.b16 %v623
        %v1796 = vunpack.c.l.b16 %v624
        %v1797 = vunpack.c.h.b16 %v624
        %v1798 = vunpack.c.l.b16 %v625
        %v1799 = vunpack.c.h.b16 %v625
        %v1800 = vunpack.c.l.b16 %v626
        %v1801 = vunpack.c.h.b16 %v626
        %v1802 = vunpack.c.l.b16 %v627
        %v1803 = vunpack.c.h.b16 %v627
        %v1804 = vunpack.c.l.b16 %v628
        %v1805 = vunpack.c.h.b16 %v628
        %v1806 = vunpack.c.l.b16 %v629
        %v1807 = vunpack.c.h.b16 %v629
        %v1808 = vunpack.c.l.b16 %v630
        %v1809 = vunpack.c.h.b16 %v630
        %v1810 = vunpack.c.l.b16 %v631
        %v1811 = vunpack.c.h.b16 %v631
        %v1812 = vunpack.c.l.b16 %v632
        %v1813 = vunpack.c.h.b16 %v632
        %v1814 = vunpack.c.l.b16 %v633
        %v1815 = vunpack.c.h.b16 %v633
        %v1816 = vunpack.c.l.b16 %v634
        %v1817 = vunpack.c.h.b16 %v634
        %v1818 = vunpack.c.l.b16 %v635
        %v1819 = vunpack.c.h.b16 %v635
        %v1820 = vunpack.c.l.b16 %v636
        %v1821 = vunpack.c.h.b16 %v636
        %v1822 = vunpack.c.l.b16 %v637
        %v1823 = vunpack.c.h.b16 %v637
        %v1824 = vunpack.c.l.b16 %v638
        %v1825 = vunpack.c.h.b16 %v638
        %v1826 = vunpack.c.l.b16 %v639
        %v1827 = vunpack.c.h.b16 %v639
        %v1828 = vunpack.c.l.b16 %v640
        %v1829 = vunpack.c.h.b16 %v640
        %v1830 = vunpack.c.l.b16 %v641
        %v1831 = vunpack.c.h.b16 %v641
        %v1832 = vunpack.c.l.b16 %v642
        %v1833 = vunpack.c.h.b16 %v642
        %v1834 = vunpack.c.l.b16 %v643
        %v1835 = vunpack.c.h.b16 %v643
        %v1836 = vunpack.c.l.b16 %v644
        %v1837 = vunpack.c.h.b16 %v644
        %v1838 = vunpack.c.l.b16 %v645
        %v1839 = vunpack.c.h.b16 %v645
        %v1840 = vunpack.c.l.b16 %v646
        %v1841 = vunpack.c.h.b16 %v646
        %v1842 = vunpack.c.l.b16 %v647
        %v1843 = vunpack.c.h.b16 %v647
        %v1844 = vunpack.c.l.b16 %v648
        %v1845 = vunpack.c.h.b16 %v648
        %v1846 = vunpack.c.l.b16 %v649
        %v1847 = vunpack.c.h.b16 %v649
        %v1848 = vunpack.c.l.b16 %v650
        %v1849 = vunpack.c.h.b16 %v650
        %v1850 = vunpack.c.l.b16 %v651
        %v1851 = vunpack.c.h.b16 %v651
        %v1852 = vunpack.c.l.b16 %v652
        %v1853 = vunpack.c.h.b16 %v652
        %v1854 = vunpack.c.l.b16 %v653
        %v1855 = vunpack.c.h.b16 %v653
        %v1856 = vunpack.c.l.b16 %v654
        %v1857 = vunpack.c.h.b16 %v654
        %v1858 = vunpack.c.l.b16 %v655
        %v1859 = vunpack.c.h.b16 %v655
        %v1860 = vunpack.c.l.b16 %v656
        %v1861 = vunpack.c.h.b16 %v656
        %v1862 = vunpack.c.l.b16 %v657
        %v1863 = vunpack.c.h.b16 %v657
        %v1864 = vunpack.c.l.b16 %v658
        %v1865 = vunpack.c.h.b16 %v658
        %v1866 = vunpack.c.l.b16 %v659
        %v1867 = vunpack.c.h.b16 %v659
        %v1868 = vunpack.c.l.b16 %v660
        %v1869 = vunpack.c.h.b16 %v660
        %v1870 = vunpack.c.l.b16 %v661
        %v1871 = vunpack.c.h.b16 %v661
        %v1872 = vunpack.c.l.b16 %v662
        %v1873 = vunpack.c.h.b16 %v662
        %v1874 = vunpack.c.l.b16 %v663
        %v1875 = vunpack.c.h.b16 %v663
        %v1876 = vunpack.c.l.b16 %v664
        %v1877 = vunpack.c.h.b16 %v664
        %v1878 = vunpack.c.l.b16 %v665
        %v1879 = vunpack.c.h.b16 %v665
        %v1880 = vunpack.c.l.b16 %v666
        %v1881 = vunpack.c.h.b16 %v666
        %v1882 = vunpack.c.l.b16 %v667
        %v1883 = vunpack.c.h.b16 %v667
        %v1884 = vunpack.c.l.b16 %v668
        %v1885 = vunpack.c.h.b16 %v668
        %v1886 = vunpack.c.l.b16 %v669
        %v1887 = vunpack.c.h.b16 %v669
        %v1888 = vunpack.c.l.b16 %v670
        %v1889 = vunpack.c.h.b16 %v670
        %v1890 = vunpack.c.l.b16 %v671
        %v1891 = vunpack.c.h.b16 %v671
        %v1892 = vunpack.c.l.b16 %v672
        %v1893 = vunpack.c.h.b16 %v672
        %v1894 = vunpack.c.l.b16 %v673
        %v1895 = vunpack.c.h.b16 %v673
        %v1896 = vunpack.c.l.b16 %v674
        %v1897 = vunpack.c.h.b16 %v674
        %v1898 = vunpack.c.l.b16 %v675
        %v1899 = vunpack.c.h.b16 %v675
        %v1900 = vunpack.c.l.b16 %v676
        %v1901 = vunpack.c.h.b16 %v676
        %v1902 = vunpack.c.l.b16 %v677
        %v1903 = vunpack.c.h.b16 %v677
        %v1904 = vunpack.c.l.b16 %v678
        %v1905 = vunpack.c.h.b16 %v678
        %v1906 = vunpack.c.l.b16 %v679
        %v1907 = vunpack.c.h.b16 %v679
        %v1908 = vunpack.c.l.b16 %v680
        %v1909 = vunpack.c.h.b16 %v680
        %v1910 = vunpack.c.l.b16 %v681
        %v1911 = vunpack.c.h.b16 %v681
        %v1912 = vunpack.c.l.b16 %v682
        %v1913 = vunpack.c.h.b16 %v682
        %v1914 = vunpack.c.l.b16 %v683
        %v1915 = vunpack.c.h.b16 %v683
        %v1916 = vunpack.c.l.b16 %v684
        %v1917 = vunpack.c.h.b16 %v684
        %v1918 = vunpack.c.l.b16 %v685
        %v1919 = vunpack.c.h.b16 %v685
        %v1920 = vunpack.c.l.b16 %v686
        %v1921 = vunpack.c.h.b16 %v686
        %v1922 = vunpack.c.l.b16 %v687
        %v1923 = vunpack.c.h.b16 %v687
        %v1924 = vunpack.c.l.b16 %v688
        %v1925 = vunpack.c.h.b16 %v688
        %v1926 = vunpack.c.l.b16 %v689
        %v1927 = vunpack.c.h.b16 %v689
        %v1928 = vunpack.c.l.b16 %v690
        %v1929 = vunpack.c.h.b16 %v690
        %v1930 = vunpack.c.l.b16 %v691
        %v1931 = vunpack.c.h.b16 %v691
        %v1932 = vunpack.c.l.b16 %v692
        %v1933 = vunpack.c.h.b16 %v692
        %v1934 = vunpack.c.l.b16 %v693
        %v1935 = vunpack.c.h.b16 %v693
        %v1936 = vunpack.c.l.b16 %v694
        %v1937 = vunpack.c.h.b16 %v694
        %v1938 = vunpack.c.l.b16 %v695
        %v1939 = vunpack.c.h.b16 %v695
        %v1940 = vunpack.c.l.b16 %v696
        %v1941 = vunpack.c.h.b16 %v696
        %v1942 = vunpack.c.l.b16 %v697
        %v1943 = vunpack.c.h.b16 %v697
        %v1944 = vunpack.c.l.b16 %v698
        %v1945 = vunpack.c.h.b16 %v698
        %v1946 = vunpack.c.l.b16 %v699
        %v1947 = vunpack.c.h.b16 %v699
        %v1948 = vunpack.c.l.b16 %v700
        %v1949 = vunpack.c.h.b16 %v700
        %v1950 = vunpack.c.l.b16 %v701
        %v1951 = vunpack.c.h.b16 %v701
        %v1952 = vunpack.c.l.b16 %v702
        %v1953 = vunpack.c.h.b16 %v702
        %v1954 = vunpack.c.l.b16 %v703
        %v1955 = vunpack.c.h.b16 %v703
        %v1956 = vunpack.c.l.b16 %v704
        %v1957 = vunpack.c.h.b16 %v704
        %v1958 = vunpack.c.l.b16 %v705
        %v1959 = vunpack.c.h.b16 %v705
        %v1960 = vunpack.c.l.b16 %v706
        %v1961 = vunpack.c.h.b16 %v706
        %v1962 = vunpack.c.l.b16 %v707
        %v1963 = vunpack.c.h.b16 %v707
        %v1964 = vunpack.c.l.b16 %v708
        %v1965 = vunpack.c.h.b16 %v708
        %v1966 = vunpack.c.l.b16 %v709
        %v1967 = vunpack.c.h.b16 %v709
        %v1968 = vunpack.c.l.b16 %v710
        %v1969 = vunpack.c.h.b16 %v710
        %v1970 = vunpack.c.l.b16 %v711
        %v1971 = vunpack.c.h.b16 %v711
        %v1972 = vunpack.c.l.b16 %v712
        %v1973 = vunpack.c.h.b16 %v712
        %v1974 = vunpack.c.l.b16 %v713
        %v1975 = vunpack.c.h.b16 %v713
        %v1976 = vunpack.c.l.b16 %v714
        %v1977 = vunpack.c.h.b16 %v714
        %v1978 = vunpack.c.l.b16 %v715
        %v1979 = vunpack.c.h.b16 %v715
        %v1980 = vunpack.c.l.b16 %v716
        %v1981 = vunpack.c.h.b16 %v716
        %v1982 = vunpack.c.l.b16 %v717
        %v1983 = vunpack.c.h.b16 %v717
        %v1984 = vunpack.c.l.b16 %v718
        %v1985 = vunpack.c.h.b16 %v718
        %v1986 = vunpack.c.l.b16 %v719
        %v1987 = vunpack.c.h.b16 %v719
        %v1988 = vunpack.c.l.b16 %v720
        %v1989 = vunpack.c.h.b16 %v720
        %v1990 = vunpack.c.l.b16 %v721
        %v1991 = vunpack.c.h.b16 %v721
        %v1992 = vunpack.c.l.b16 %v722
        %v1993 = vunpack.c.h.b16 %v722
        %v1994 = vunpack.c.l.b16 %v723
        %v1995 = vunpack.c.h.b16 %v723
        %v1996 = vpack.c.b16 %v1230, %v1228
        %v1997 = vpack.c.b16 %v1231, %v1229
        %v1998 = vpack.c.b16 %v1234, %v1232
        %v1999 = vpack.c.b16 %v1235, %v1233
        %v2000 = vpack.c.b16 %v1238, %v1236
        %v2001 = vpack.c.b16 %v1239, %v1237
        %v2002 = vpack.c.b16 %v1242, %v1240
        %v2003 = vpack.c.b16 %v1243, %v1241
        %v2004 = vpack.c.b16 %v1246, %v1244
        %v2005 = vpack.c.b16 %v1247, %v1245
        %v2006 = vpack.c.b16 %v1250, %v1248
        %v2007 = vpack.c.b16 %v1251, %v1249
        %v2008 = vpack.c.b16 %v1254, %v1252
        %v2009 = vpack.c.b16 %v1255, %v1253
        %v2010 = vpack.c.b16 %v1258, %v1256
        %v2011 = vpack.c.b16 %v1259, %v1257
        %v2012 = vpack.c.b16 %v1262, %v1260
        %v2013 = vpack.c.b16 %v1263, %v1261
        %v2014 = vpack.c.b16 %v1266, %v1264
        %v2015 = vpack.c.b16 %v1267, %v1265
        %v2016 = vpack.c.b16 %v1270, %v1268
        %v2017 = vpack.c.b16 %v1271, %v1269
        %v2018 = vpack.c.b16 %v1274, %v1272
        %v2019 = vpack.c.b16 %v1275, %v1273
        %v2020 = vpack.c.b16 %v1278, %v1276
        %v2021 = vpack.c.b16 %v1279, %v1277
        %v2022 = vpack.c.b16 %v1282, %v1280
        %v2023 = vpack.c.b16 %v1283, %v1281
        %v2024 = vpack.c.b16 %v1286, %v1284
        %v2025 = vpack.c.b16 %v1287, %v1285
        %v2026 = vpack.c.b16 %v1290, %v1288
        %v2027 = vpack.c.b16 %v1291, %v1289
        %v2028 = vpack.c.b16 %v1294, %v1292
        %v2029 = vpack.c.b16 %v1295, %v1293
        %v2030 = vpack.c.b16 %v1298, %v1296
        %v2031 = vpack.c.b16 %v1299, %v1297
        %v2032 = vpack.c.b16 %v1302, %v1300
        %v2033 = vpack.c.b16 %v1303, %v1301
        %v2034 = vpack.c.b16 %v1306, %v1304
        %v2035 = vpack.c.b16 %v1307, %v1305
        %v2036 = vpack.c.b16 %v1310, %v1308
        %v2037 = vpack.c.b16 %v1311, %v1309
        %v2038 = vpack.c.b16 %v1314, %v1312
        %v2039 = vpack.c.b16 %v1315, %v1313
        %v2040 = vpack.c.b16 %v1318, %v1316
        %v2041 = vpack.c.b16 %v1319, %v1317
        %v2042 = vpack.c.b16 %v1322, %v1320
        %v2043 = vpack.c.b16 %v1323, %v1321
        %v2044 = vpack.c.b16 %v1326, %v1324
        %v2045 = vpack.c.b16 %v1327, %v1325
        %v2046 = vpack.c.b16 %v1330, %v1328
        %v2047 = vpack.c.b16 %v1331, %v1329
        %v2048 = vpack.c.b16 %v1334, %v1332
        %v2049 = vpack.c.b16 %v1335, %v1333
        %v2050 = vpack.c.b16 %v1338, %v1336
        %v2051 = vpack.c.b16 %v1339, %v1337
        %v2052 = vpack.c.b16 %v1342, %v1340
        %v2053 = vpack.c.b16 %v1343, %v1341
        %v2054 = vpack.c.b16 %v1346, %v1344
        %v2055 = vpack.c.b16 %v1347, %v1345
        %v2056 = vpack.c.b16 %v1350, %v1348
        %v2057 = vpack.c.b16 %v1351, %v1349
        %v2058 = vpack.c.b16 %v1354, %v1352
        %v2059 = vpack.c.b16 %v1355, %v1353
        %v2060 = vpack.c.b16 %v1358, %v1356
        %v2061 = vpack.c.b16 %v1359, %v1357
        %v2062 = vpack.c.b16 %v1362, %v1360
        %v2063 = vpack.c.b16 %v1363, %v1361
        %v2064 = vpack.c.b16 %v1366, %v1364
        %v2065 = vpack.c.b16 %v1367, %v1365
        %v2066 = vpack.c.b16 %v1370, %v1368
        %v2067 = vpack.c.b16 %v1371, %v1369
        %v2068 = vpack.c.b16 %v1374, %v1372
        %v2069 = vpack.c.b16 %v1375, %v1373
        %v2070 = vpack.c.b16 %v1378, %v1376
        %v2071 = vpack.c.b16 %v1379, %v1377
        %v2072 = vpack.c.b16 %v1382, %v1380
        %v2073 = vpack.c.b16 %v1383, %v1381
        %v2074 = vpack.c.b16 %v1386, %v1384
        %v2075 = vpack.c.b16 %v1387, %v1385
        %v2076 = vpack.c.b16 %v1390, %v1388
        %v2077 = vpack.c.b16 %v1391, %v1389
        %v2078 = vpack.c.b16 %v1394, %v1392
        %v2079 = vpack.c.b16 %v1395, %v1393
        %v2080 = vpack.c.b16 %v1398, %v1396
        %v2081 = vpack.c.b16 %v1399, %v1397
        %v2082 = vpack.c.b16 %v1402, %v1400
        %v2083 = vpack.c.b16 %v1403, %v1401
        %v2084 = vpack.c.b16 %v1406, %v1404
        %v2085 = vpack.c.b16 %v1407, %v1405
        %v2086 = vpack.c.b16 %v1410, %v1408
        %v2087 = vpack.c.b16 %v1411, %v1409
        %v2088 = vpack.c.b16 %v1414, %v1412
        %v2089 = vpack.c.b16 %v1415, %v1413
        %v2090 = vpack.c.b16 %v1418, %v1416
        %v2091 = vpack.c.b16 %v1419, %v1417
        %v2092 = vpack.c.b16 %v1422, %v1420
        %v2093 = vpack.c.b16 %v1423, %v1421
        %v2094 = vpack.c.b16 %v1426, %v1424
        %v2095 = vpack.c.b16 %v1427, %v1425
        %v2096 = vpack.c.b16 %v1430, %v1428
        %v2097 = vpack.c.b16 %v1431, %v1429
        %v2098 = vpack.c.b16 %v1434, %v1432
        %v2099 = vpack.c.b16 %v1435, %v1433
        %v2100 = vpack.c.b16 %v1438, %v1436
        %v2101 = vpack.c.b16 %v1439, %v1437
        %v2102 = vpack.c.b16 %v1442, %v1440
        %v2103 = vpack.c.b16 %v1443, %v1441
        %v2104 = vpack.c.b16 %v1446, %v1444
        %v2105 = vpack.c.b16 %v1447, %v1445
        %v2106 = vpack.c.b16 %v1450, %v1448
        %v2107 = vpack.c.b16 %v1451, %v1449
        %v2108 = vpack.c.b16 %v1454, %v1452
        %v2109 = vpack.c.b16 %v1455, %v1453
        %v2110 = vpack.c.b16 %v1458, %v1456
        %v2111 = vpack.c.b16 %v1459, %v1457
        %v2112 = vpack.c.b16 %v1462, %v1460
        %v2113 = vpack.c.b16 %v1463, %v1461
        %v2114 = vpack.c.b16 %v1466, %v1464
        %v2115 = vpack.c.b16 %v1467, %v1465
        %v2116 = vpack.c.b16 %v1470, %v1468
        %v2117 = vpack.c.b16 %v1471, %v1469
        %v2118 = vpack.c.b16 %v1474, %v1472
        %v2119 = vpack.c.b16 %v1475, %v1473
        %v2120 = vpack.c.b16 %v1478, %v1476
        %v2121 = vpack.c.b16 %v1479, %v1477
        %v2122 = vpack.c.b16 %v1482, %v1480
        %v2123 = vpack.c.b16 %v1483, %v1481
        %v2124 = vpack.c.b16 %v1486, %v1484
        %v2125 = vpack.c.b16 %v1487, %v1485
        %v2126 = vpack.c.b16 %v1490, %v1488
        %v2127 = vpack.c.b16 %v1491, %v1489
        %v2128 = vpack.c.b16 %v1494, %v1492
        %v2129 = vpack.c.b16 %v1495, %v1493
        %v2130 = vpack.c.b16 %v1498, %v1496
        %v2131 = vpack.c.b16 %v1499, %v1497
        %v2132 = vpack.c.b16 %v1502, %v1500
        %v2133 = vpack.c.b16 %v1503, %v1501
        %v2134 = vpack.c.b16 %v1506, %v1504
        %v2135 = vpack.c.b16 %v1507, %v1505
        %v2136 = vpack.c.b16 %v1510, %v1508
        %v2137 = vpack.c.b16 %v1511, %v1509
        %v2138 = vpack.c.b16 %v1514, %v1512
        %v2139 = vpack.c.b16 %v1515, %v1513
        %v2140 = vpack.c.b16 %v1518, %v1516
        %v2141 = vpack.c.b16 %v1519, %v1517
        %v2142 = vpack.c.b16 %v1522, %v1520
        %v2143 = vpack.c.b16 %v1523, %v1521
        %v2144 = vpack.c.b16 %v1526, %v1524
        %v2145 = vpack.c.b16 %v1527, %v1525
        %v2146 = vpack.c.b16 %v1530, %v1528
        %v2147 = vpack.c.b16 %v1531, %v1529
        %v2148 = vpack.c.b16 %v1534, %v1532
        %v2149 = vpack.c.b16 %v1535, %v1533
        %v2150 = vpack.c.b16 %v1538, %v1536
        %v2151 = vpack.c.b16 %v1539, %v1537
        %v2152 = vpack.c.b16 %v1542, %v1540
        %v2153 = vpack.c.b16 %v1543, %v1541
        %v2154 = vpack.c.b16 %v1546, %v1544
        %v2155 = vpack.c.b16 %v1547, %v1545
        %v2156 = vpack.c.b16 %v1550, %v1548
        %v2157 = vpack.c.b16 %v1551, %v1549
        %v2158 = vpack.c.b16 %v1554, %v1552
        %v2159 = vpack.c.b16 %v1555, %v1553
        %v2160 = vpack.c.b16 %v1558, %v1556
        %v2161 = vpack.c.b16 %v1559, %v1557
        %v2162 = vpack.c.b16 %v1562, %v1560
        %v2163 = vpack.c.b16 %v1563, %v1561
        %v2164 = vpack.c.b16 %v1566, %v1564
        %v2165 = vpack.c.b16 %v1567, %v1565
        %v2166 = vpack.c.b16 %v1570, %v1568
        %v2167 = vpack.c.b16 %v1571, %v1569
        %v2168 = vpack.c.b16 %v1574, %v1572
        %v2169 = vpack.c.b16 %v1575, %v1573
        %v2170 = vpack.c.b16 %v1578, %v1576
        %v2171 = vpack.c.b16 %v1579, %v1577
        %v2172 = vpack.c.b16 %v1582, %v1580
        %v2173 = vpack.c.b16 %v1583, %v1581
        %v2174 = vpack.c.b16 %v1586, %v1584
        %v2175 = vpack.c.b16 %v1587, %v1585
        %v2176 = vpack.c.b16 %v1590, %v1588
        %v2177 = vpack.c.b16 %v1591, %v1589
        %v2178 = vpack.c.b16 %v1594, %v1592
        %v2179 = vpack.c.b16 %v1595, %v1593
        %v2180 = vpack.c.b16 %v1598, %v1596
        %v2181 = vpack.c.b16 %v1599, %v1597
        %v2182 = vpack.c.b16 %v1602, %v1600
        %v2183 = vpack.c.b16 %v1603, %v1601
        %v2184 = vpack.c.b16 %v1606, %v1604
        %v2185 = vpack.c.b16 %v1607, %v1605
        %v2186 = vpack.c.b16 %v1610, %v1608
        %v2187 = vpack.c.b16 %v1611, %v1609
        %v2188 = vpack.c.b16 %v1614, %v1612
        %v2189 = vpack.c.b16 %v1615, %v1613
        %v2190 = vpack.c.b16 %v1618, %v1616
        %v2191 = vpack.c.b16 %v1619, %v1617
        %v2192 = vpack.c.b16 %v1622, %v1620
        %v2193 = vpack.c.b16 %v1623, %v1621
        %v2194 = vpack.c.b16 %v1626, %v1624
        %v2195 = vpack.c.b16 %v1627, %v1625
        %v2196 = vpack.c.b16 %v1630, %v1628
        %v2197 = vpack.c.b16 %v1631, %v1629
        %v2198 = vpack.c.b16 %v1634, %v1632
        %v2199 = vpack.c.b16 %v1635, %v1633
        %v2200 = vpack.c.b16 %v1638, %v1636
        %v2201 = vpack.c.b16 %v1639, %v1637
        %v2202 = vpack.c.b16 %v1642, %v1640
        %v2203 = vpack.c.b16 %v1643, %v1641
        %v2204 = vpack.c.b16 %v1646, %v1644
        %v2205 = vpack.c.b16 %v1647, %v1645
        %v2206 = vpack.c.b16 %v1650, %v1648
        %v2207 = vpack.c.b16 %v1651, %v1649
        %v2208 = vpack.c.b16 %v1654, %v1652
        %v2209 = vpack.c.b16 %v1655, %v1653
        %v2210 = vpack.c.b16 %v1658, %v1656
        %v2211 = vpack.c.b16 %v1659, %v1657
        %v2212 = vpack.c.b16 %v1662, %v1660
        %v2213 = vpack.c.b16 %v1663, %v1661
        %v2214 = vpack.c.b16 %v1666, %v1664
        %v2215 = vpack.c.b16 %v1667, %v1665
        %v2216 = vpack.c.b16 %v1670, %v1668
        %v2217 = vpack.c.b16 %v1671, %v1669
        %v2218 = vpack.c.b16 %v1674, %v1672
        %v2219 = vpack.c.b16 %v1675, %v1673
        %v2220 = vpack.c.b16 %v1678, %v1676
        %v2221 = vpack.c.b16 %v1679, %v1677
        %v2222 = vpack.c.b16 %v1682, %v1680
        %v2223 = vpack.c.b16 %v1683, %v1681
        %v2224 = vpack.c.b16 %v1686, %v1684
        %v2225 = vpack.c.b16 %v1687, %v1685
        %v2226 = vpack.c.b16 %v1690, %v1688
        %v2227 = vpack.c.b16 %v1691, %v1689
        %v2228 = vpack.c.b16 %v1694, %v1692
        %v2229 = vpack.c.b16 %v1695, %v1693
        %v2230 = vpack.c.b16 %v1698, %v1696
        %v2231 = vpack.c.b16 %v1699, %v1697
        %v2232 = vpack.c.b16 %v1702, %v1700
        %v2233 = vpack.c.b16 %v1703, %v1701
        %v2234 = vpack.c.b16 %v1706, %v1704
        %v2235 = vpack.c.b16 %v1707, %v1705
        %v2236 = vpack.c.b16 %v1710, %v1708
        %v2237 = vpack.c.b16 %v1711, %v1709
        %v2238 = vpack.c.b16 %v1714, %v1712
        %v2239 = vpack.c.b16 %v1715, %v1713
        %v2240 = vpack.c.b16 %v1718, %v1716
        %v2241 = vpack.c.b16 %v1719, %v1717
        %v2242 = vpack.c.b16 %v1722, %v1720
        %v2243 = vpack.c.b16 %v1723, %v1721
        %v2244 = vpack.c.b16 %v1726, %v1724
        %v2245 = vpack.c.b16 %v1727, %v1725
        %v2246 = vpack.c.b16 %v1730, %v1728
        %v2247 = vpack.c.b16 %v1731, %v1729
        %v2248 = vpack.c.b16 %v1734, %v1732
        %v2249 = vpack.c.b16 %v1735, %v1733
        %v2250 = vpack.c.b16 %v1738, %v1736
        %v2251 = vpack.c.b16 %v1739, %v1737
        %v2252 = vpack.c.b16 %v1742, %v1740
        %v2253 = vpack.c.b16 %v1743, %v1741
        %v2254 = vpack.c.b16 %v1746, %v1744
        %v2255 = vpack.c.b16 %v1747, %v1745
        %v2256 = vpack.c.b16 %v1750, %v1748
        %v2257 = vpack.c.b16 %v1751, %v1749
        %v2258 = vpack.c.b16 %v1754, %v1752
        %v2259 = vpack.c.b16 %v1755, %v1753
        %v2260 = vpack.c.b16 %v1758, %v1756
        %v2261 = vpack.c.b16 %v1759, %v1757
        %v2262 = vpack.c.b16 %v1762, %v1760
        %v2263 = vpack.c.b16 %v1763, %v1761
        %v2264 = vpack.c.b16 %v1766, %v1764
        %v2265 = vpack.c.b16 %v1767, %v1765
        %v2266 = vpack.c.b16 %v1770, %v1768
        %v2267 = vpack.c.b16 %v1771, %v1769
        %v2268 = vpack.c.b16 %v1774, %v1772
        %v2269 = vpack.c.b16 %v1775, %v1773
        %v2270 = vpack.c.b16 %v1778, %v1776
        %v2271 = vpack.c.b16 %v1779, %v1777
        %v2272 = vpack.c.b16 %v1782, %v1780
        %v2273 = vpack.c.b16 %v1783, %v1781
        %v2274 = vpack.c.b16 %v1786, %v1784
        %v2275 = vpack.c.b16 %v1787, %v1785
        %v2276 = vpack.c.b16 %v1790, %v1788
        %v2277 = vpack.c.b16 %v1791, %v1789
        %v2278 = vpack.c.b16 %v1794, %v1792
        %v2279 = vpack.c.b16 %v1795, %v1793
        %v2280 = vpack.c.b16 %v1798, %v1796
        %v2281 = vpack.c.b16 %v1799, %v1797
        %v2282 = vpack.c.b16 %v1802, %v1800
        %v2283 = vpack.c.b16 %v1803, %v1801
        %v2284 = vpack.c.b16 %v1806, %v1804
        %v2285 = vpack.c.b16 %v1807, %v1805
        %v2286 = vpack.c.b16 %v1810, %v1808
        %v2287 = vpack.c.b16 %v1811, %v1809
        %v2288 = vpack.c.b16 %v1814, %v1812
        %v2289 = vpack.c.b16 %v1815, %v1813
        %v2290 = vpack.c.b16 %v1818, %v1816
        %v2291 = vpack.c.b16 %v1819, %v1817
        %v2292 = vpack.c.b16 %v1822, %v1820
        %v2293 = vpack.c.b16 %v1823, %v1821
        %v2294 = vpack.c.b16 %v1826, %v1824
        %v2295 = vpack.c.b16 %v1827, %v1825
        %v2296 = vpack.c.b16 %v1830, %v1828
        %v2297 = vpack.c.b16 %v1831, %v1829
        %v2298 = vpack.c.b16 %v1834, %v1832
        %v2299 = vpack.c.b16 %v1835, %v1833
        %v2300 = vpack.c.b16 %v1838, %v1836
        %v2301 = vpack.c.b16 %v1839, %v1837
        %v2302 = vpack.c.b16 %v1842, %v1840
        %v2303 = vpack.c.b16 %v1843, %v1841
        %v2304 = vpack.c.b16 %v1846, %v1844
        %v2305 = vpack.c.b16 %v1847, %v1845
        %v2306 = vpack.c.b16 %v1850, %v1848
        %v2307 = vpack.c.b16 %v1851, %v1849
        %v2308 = vpack.c.b16 %v1854, %v1852
        %v2309 = vpack.c.b16 %v1855, %v1853
        %v2310 = vpack.c.b16 %v1858, %v1856
        %v2311 = vpack.c.b16 %v1859, %v1857
        %v2312 = vpack.c.b16 %v1862, %v1860
        %v2313 = vpack.c.b16 %v1863, %v1861
        %v2314 = vpack.c.b16 %v1866, %v1864
        %v2315 = vpack.c.b16 %v1867, %v1865
        %v2316 = vpack.c.b16 %v1870, %v1868
        %v2317 = vpack.c.b16 %v1871, %v1869
        %v2318 = vpack.c.b16 %v1874, %v1872
        %v2319 = vpack.c.b16 %v1875, %v1873
        %v2320 = vpack.c.b16 %v1878, %v1876
        %v2321 = vpack.c.b16 %v1879, %v1877
        %v2322 = vpack.c.b16 %v1882, %v1880
        %v2323 = vpack.c.b16 %v1883, %v1881
        %v2324 = vpack.c.b16 %v1886, %v1884
        %v2325 = vpack.c.b16 %v1887, %v1885
        %v2326 = vpack.c.b16 %v1890, %v1888
        %v2327 = vpack.c.b16 %v1891, %v1889
        %v2328 = vpack.c.b16 %v1894, %v1892
        %v2329 = vpack.c.b16 %v1895, %v1893
        %v2330 = vpack.c.b16 %v1898, %v1896
        %v2331 = vpack.c.b16 %v1899, %v1897
        %v2332 = vpack.c.b16 %v1902, %v1900
        %v2333 = vpack.c.b16 %v1903, %v1901
        %v2334 = vpack.c.b16 %v1906, %v1904
        %v2335 = vpack.c.b16 %v1907, %v1905
        %v2336 = vpack.c.b16 %v1910, %v1908
        %v2337 = vpack.c.b16 %v1911, %v1909
        %v2338 = vpack.c.b16 %v1914, %v1912
        %v2339 = vpack.c.b16 %v1915, %v1913
        %v2340 = vpack.c.b16 %v1918, %v1916
        %v2341 = vpack.c.b16 %v1919, %v1917
        %v2342 = vpack.c.b16 %v1922, %v1920
        %v2343 = vpack.c.b16 %v1923, %v1921
        %v2344 = vpack.c.b16 %v1926, %v1924
        %v2345 = vpack.c.b16 %v1927, %v1925
        %v2346 = vpack.c.b16 %v1930, %v1928
        %v2347 = vpack.c.b16 %v1931, %v1929
        %v2348 = vpack.c.b16 %v1934, %v1932
        %v2349 = vpack.c.b16 %v1935, %v1933
        %v2350 = vpack.c.b16 %v1938, %v1936
        %v2351 = vpack.c.b16 %v1939, %v1937
        %v2352 = vpack.c.b16 %v1942, %v1940
        %v2353 = vpack.c.b16 %v1943, %v1941
        %v2354 = vpack.c.b16 %v1946, %v1944
        %v2355 = vpack.c.b16 %v1947, %v1945
        %v2356 = vpack.c.b16 %v1950, %v1948
        %v2357 = vpack.c.b16 %v1951, %v1949
        %v2358 = vpack.c.b16 %v1954, %v1952
        %v2359 = vpack.c.b16 %v1955, %v1953
        %v2360 = vpack.c.b16 %v1958, %v1956
        %v2361 = vpack.c.b16 %v1959, %v1957
        %v2362 = vpack.c.b16 %v1962, %v1960
        %v2363 = vpack.c.b16 %v1963, %v1961
        %v2364 = vpack.c.b16 %v1966, %v1964
        %v2365 = vpack.c.b16 %v1967, %v1965
        %v2366 = vpack.c.b16 %v1970, %v1968
        %v2367 = vpack.c.b16 %v1971, %v1969
        %v2368 = vpack.c.b16 %v1974, %v1972
        %v2369 = vpack.c.b16 %v1975, %v1973
        %v2370 = vpack.c.b16 %v1978, %v1976
        %v2371 = vpack.c.b16 %v1979, %v1977
        %v2372 = vpack.c.b16 %v1982, %v1980
        %v2373 = vpack.c.b16 %v1983, %v1981
        %v2374 = vpack.c.b16 %v1986, %v1984
        %v2375 = vpack.c.b16 %v1987, %v1985
        %v2376 = vpack.c.b16 %v1990, %v1988
        %v2377 = vpack.c.b16 %v1991, %v1989
        %v2378 = vpack.c.b16 %v1994, %v1992
        %v2379 = vpack.c.b16 %v1995, %v1993
        %2764 = vmatpush.bf16.msra.mxu0 %v2010
        %2765 = vmatpush.bf16.msra.mxu0 %v2008
        %2766 = vmatpush.bf16.msra.mxu0 %v2006
        %2767 = vmatpush.bf16.msra.mxu0 %v2004
        %2768 = vmatpush.bf16.msra.mxu0 %v2002
        %2769 = vmatpush.bf16.msra.mxu0 %v2000
        %2770 = vmatpush.bf16.msra.mxu0 %v1998
        %2771 = vmatpush.bf16.msra.mxu0 %v1996
        %2772 = vmatmul.bf16.gmra.mxu0 %v796
        %v2773 = vpop.f32.mrf.mxu0
        %v2774 = vadd.f32 0.0, %v2773
        %v2775 = vpop.f32.mrf.mxu0
        %v2776 = vadd.f32 0.0, %v2775
        %2777 = vdwg.mxu0
        %2778 = vmatpush.bf16.msra.mxu0 %v2026
        %2779 = vmatpush.bf16.msra.mxu0 %v2024
        %2780 = vmatpush.bf16.msra.mxu0 %v2022
        %2781 = vmatpush.bf16.msra.mxu0 %v2020
        %2782 = vmatpush.bf16.msra.mxu0 %v2018
        %2783 = vmatpush.bf16.msra.mxu0 %v2016
        %2784 = vmatpush.bf16.msra.mxu0 %v2014
        %2785 = vmatpush.bf16.msra.mxu0 %v2012
        %2786 = vmatmul.bf16.gmra.mxu0 %v797
        %v2787 = vpop.f32.mrf.mxu0
        %v2788 = vadd.f32 %v2774, %v2787
        %v2789 = vpop.f32.mrf.mxu0
        %v2790 = vadd.f32 %v2776, %v2789
        %2791 = vdwg.mxu0
        %2792 = vmatpush.bf16.msra.mxu0 %v2042
        %2793 = vmatpush.bf16.msra.mxu0 %v2040
        %2794 = vmatpush.bf16.msra.mxu0 %v2038
        %2795 = vmatpush.bf16.msra.mxu0 %v2036
        %2796 = vmatpush.bf16.msra.mxu0 %v2034
        %2797 = vmatpush.bf16.msra.mxu0 %v2032
        %2798 = vmatpush.bf16.msra.mxu0 %v2030
        %2799 = vmatpush.bf16.msra.mxu0 %v2028
        %2800 = vmatmul.bf16.gmra.mxu0 %v798
        %v2801 = vpop.f32.mrf.mxu0
        %v2802 = vadd.f32 %v2788, %v2801
        %v2803 = vpop.f32.mrf.mxu0
        %v2804 = vadd.f32 %v2790, %v2803
        %2805 = vdwg.mxu0
        %2806 = vmatpush.bf16.msra.mxu0 %v2058
        %2807 = vmatpush.bf16.msra.mxu0 %v2056
        %2808 = vmatpush.bf16.msra.mxu0 %v2054
        %2809 = vmatpush.bf16.msra.mxu0 %v2052
        %2810 = vmatpush.bf16.msra.mxu0 %v2050
        %2811 = vmatpush.bf16.msra.mxu0 %v2048
        %2812 = vmatpush.bf16.msra.mxu0 %v2046
        %2813 = vmatpush.bf16.msra.mxu0 %v2044
        %2814 = vmatmul.bf16.gmra.mxu0 %v799
        %v2815 = vpop.f32.mrf.mxu0
        %v2816 = vadd.f32 %v2802, %v2815
        %v2817 = vpop.f32.mrf.mxu0
        %v2818 = vadd.f32 %v2804, %v2817
        %2819 = vdwg.mxu0
        %2820 = vmatpush.bf16.msra.mxu0 %v2074
        %2821 = vmatpush.bf16.msra.mxu0 %v2072
        %2822 = vmatpush.bf16.msra.mxu0 %v2070
        %2823 = vmatpush.bf16.msra.mxu0 %v2068
        %2824 = vmatpush.bf16.msra.mxu0 %v2066
        %2825 = vmatpush.bf16.msra.mxu0 %v2064
        %2826 = vmatpush.bf16.msra.mxu0 %v2062
        %2827 = vmatpush.bf16.msra.mxu0 %v2060
        %2828 = vmatmul.bf16.gmra.mxu0 %v800
        %v2829 = vpop.f32.mrf.mxu0
        %v2830 = vadd.f32 %v2816, %v2829
        %v2831 = vpop.f32.mrf.mxu0
        %v2832 = vadd.f32 %v2818, %v2831
        %2833 = vdwg.mxu0
        %2834 = vmatpush.bf16.msra.mxu0 %v2090
        %2835 = vmatpush.bf16.msra.mxu0 %v2088
        %2836 = vmatpush.bf16.msra.mxu0 %v2086
        %2837 = vmatpush.bf16.msra.mxu0 %v2084
        %2838 = vmatpush.bf16.msra.mxu0 %v2082
        %2839 = vmatpush.bf16.msra.mxu0 %v2080
        %2840 = vmatpush.bf16.msra.mxu0 %v2078
        %2841 = vmatpush.bf16.msra.mxu0 %v2076
        %2842 = vmatmul.bf16.gmra.mxu0 %v801
        %v2843 = vpop.f32.mrf.mxu0
        %v2844 = vadd.f32 %v2830, %v2843
        %v2845 = vpop.f32.mrf.mxu0
        %v2846 = vadd.f32 %v2832, %v2845
        %2847 = vdwg.mxu0
        %2848 = vmatpush.bf16.msra.mxu0 %v2106
        %2849 = vmatpush.bf16.msra.mxu0 %v2104
        %2850 = vmatpush.bf16.msra.mxu0 %v2102
        %2851 = vmatpush.bf16.msra.mxu0 %v2100
        %2852 = vmatpush.bf16.msra.mxu0 %v2098
        %2853 = vmatpush.bf16.msra.mxu0 %v2096
        %2854 = vmatpush.bf16.msra.mxu0 %v2094
        %2855 = vmatpush.bf16.msra.mxu0 %v2092
        %2856 = vmatmul.bf16.gmra.mxu0 %v802
        %v2857 = vpop.f32.mrf.mxu0
        %v2858 = vadd.f32 %v2844, %v2857
        %v2859 = vpop.f32.mrf.mxu0
        %v2860 = vadd.f32 %v2846, %v2859
        %2861 = vdwg.mxu0
        %2862 = vmatpush.bf16.msra.mxu0 %v2122
        %2863 = vmatpush.bf16.msra.mxu0 %v2120
        %2864 = vmatpush.bf16.msra.mxu0 %v2118
        %2865 = vmatpush.bf16.msra.mxu0 %v2116
        %2866 = vmatpush.bf16.msra.mxu0 %v2114
        %2867 = vmatpush.bf16.msra.mxu0 %v2112
        %2868 = vmatpush.bf16.msra.mxu0 %v2110
        %2869 = vmatpush.bf16.msra.mxu0 %v2108
        %2870 = vmatmul.bf16.gmra.mxu0 %v803
        %v2871 = vpop.f32.mrf.mxu0
        %v2872 = vadd.f32 %v2858, %v2871
        %v2873 = vpop.f32.mrf.mxu0
        %v2874 = vadd.f32 %v2860, %v2873
        %2875 = vdwg.mxu0
        %2876 = vmatpush.bf16.msra.mxu0 %v2138
        %2877 = vmatpush.bf16.msra.mxu0 %v2136
        %2878 = vmatpush.bf16.msra.mxu0 %v2134
        %2879 = vmatpush.bf16.msra.mxu0 %v2132
        %2880 = vmatpush.bf16.msra.mxu0 %v2130
        %2881 = vmatpush.bf16.msra.mxu0 %v2128
        %2882 = vmatpush.bf16.msra.mxu0 %v2126
        %2883 = vmatpush.bf16.msra.mxu0 %v2124
        %2884 = vmatmul.bf16.gmra.mxu0 %v804
        %v2885 = vpop.f32.mrf.mxu0
        %v2886 = vadd.f32 %v2872, %v2885
        %v2887 = vpop.f32.mrf.mxu0
        %v2888 = vadd.f32 %v2874, %v2887
        %2889 = vdwg.mxu0
        %2890 = vmatpush.bf16.msra.mxu0 %v2154
        %2891 = vmatpush.bf16.msra.mxu0 %v2152
        %2892 = vmatpush.bf16.msra.mxu0 %v2150
        %2893 = vmatpush.bf16.msra.mxu0 %v2148
        %2894 = vmatpush.bf16.msra.mxu0 %v2146
        %2895 = vmatpush.bf16.msra.mxu0 %v2144
        %2896 = vmatpush.bf16.msra.mxu0 %v2142
        %2897 = vmatpush.bf16.msra.mxu0 %v2140
        %2898 = vmatmul.bf16.gmra.mxu0 %v805
        %v2899 = vpop.f32.mrf.mxu0
        %v2900 = vadd.f32 %v2886, %v2899
        %v2901 = vpop.f32.mrf.mxu0
        %v2902 = vadd.f32 %v2888, %v2901
        %2903 = vdwg.mxu0
        %2904 = vmatpush.bf16.msra.mxu0 %v2170
        %2905 = vmatpush.bf16.msra.mxu0 %v2168
        %2906 = vmatpush.bf16.msra.mxu0 %v2166
        %2907 = vmatpush.bf16.msra.mxu0 %v2164
        %2908 = vmatpush.bf16.msra.mxu0 %v2162
        %2909 = vmatpush.bf16.msra.mxu0 %v2160
        %2910 = vmatpush.bf16.msra.mxu0 %v2158
        %2911 = vmatpush.bf16.msra.mxu0 %v2156
        %2912 = vmatmul.bf16.gmra.mxu0 %v806
        %v2913 = vpop.f32.mrf.mxu0
        %v2914 = vadd.f32 %v2900, %v2913
        %v2915 = vpop.f32.mrf.mxu0
        %v2916 = vadd.f32 %v2902, %v2915
        %2917 = vdwg.mxu0
        %2918 = vmatpush.bf16.msra.mxu0 %v2186
        %2919 = vmatpush.bf16.msra.mxu0 %v2184
        %2920 = vmatpush.bf16.msra.mxu0 %v2182
        %2921 = vmatpush.bf16.msra.mxu0 %v2180
        %2922 = vmatpush.bf16.msra.mxu0 %v2178
        %2923 = vmatpush.bf16.msra.mxu0 %v2176
        %2924 = vmatpush.bf16.msra.mxu0 %v2174
        %2925 = vmatpush.bf16.msra.mxu0 %v2172
        %2926 = vmatmul.bf16.gmra.mxu0 %v807
        %v2927 = vpop.f32.mrf.mxu0
        %v2928 = vadd.f32 %v2914, %v2927
        %v2929 = vpop.f32.mrf.mxu0
        %v2930 = vadd.f32 %v2916, %v2929
        %2931 = vdwg.mxu0
        %2932 = vmatpush.bf16.msra.mxu0 %v2202
        %2933 = vmatpush.bf16.msra.mxu0 %v2200
        %2934 = vmatpush.bf16.msra.mxu0 %v2198
        %2935 = vmatpush.bf16.msra.mxu0 %v2196
        %2936 = vmatpush.bf16.msra.mxu0 %v2194
        %2937 = vmatpush.bf16.msra.mxu0 %v2192
        %2938 = vmatpush.bf16.msra.mxu0 %v2190
        %2939 = vmatpush.bf16.msra.mxu0 %v2188
        %2940 = vmatmul.bf16.gmra.mxu0 %v808
        %v2941 = vpop.f32.mrf.mxu0
        %v2942 = vadd.f32 %v2928, %v2941
        %v2943 = vpop.f32.mrf.mxu0
        %v2944 = vadd.f32 %v2930, %v2943
        %2945 = vdwg.mxu0
        %2946 = vmatpush.bf16.msra.mxu0 %v2218
        %2947 = vmatpush.bf16.msra.mxu0 %v2216
        %2948 = vmatpush.bf16.msra.mxu0 %v2214
        %2949 = vmatpush.bf16.msra.mxu0 %v2212
        %2950 = vmatpush.bf16.msra.mxu0 %v2210
        %2951 = vmatpush.bf16.msra.mxu0 %v2208
        %2952 = vmatpush.bf16.msra.mxu0 %v2206
        %2953 = vmatpush.bf16.msra.mxu0 %v2204
        %2954 = vmatmul.bf16.gmra.mxu0 %v809
        %v2955 = vpop.f32.mrf.mxu0
        %v2956 = vadd.f32 %v2942, %v2955
        %v2957 = vpop.f32.mrf.mxu0
        %v2958 = vadd.f32 %v2944, %v2957
        %2959 = vdwg.mxu0
        %2960 = vmatpush.bf16.msra.mxu0 %v2234
        %2961 = vmatpush.bf16.msra.mxu0 %v2232
        %2962 = vmatpush.bf16.msra.mxu0 %v2230
        %2963 = vmatpush.bf16.msra.mxu0 %v2228
        %2964 = vmatpush.bf16.msra.mxu0 %v2226
        %2965 = vmatpush.bf16.msra.mxu0 %v2224
        %2966 = vmatpush.bf16.msra.mxu0 %v2222
        %2967 = vmatpush.bf16.msra.mxu0 %v2220
        %2968 = vmatmul.bf16.gmra.mxu0 %v810
        %v2969 = vpop.f32.mrf.mxu0
        %v2970 = vadd.f32 %v2956, %v2969
        %v2971 = vpop.f32.mrf.mxu0
        %v2972 = vadd.f32 %v2958, %v2971
        %2973 = vdwg.mxu0
        %2974 = vmatpush.bf16.msra.mxu0 %v2250
        %2975 = vmatpush.bf16.msra.mxu0 %v2248
        %2976 = vmatpush.bf16.msra.mxu0 %v2246
        %2977 = vmatpush.bf16.msra.mxu0 %v2244
        %2978 = vmatpush.bf16.msra.mxu0 %v2242
        %2979 = vmatpush.bf16.msra.mxu0 %v2240
        %2980 = vmatpush.bf16.msra.mxu0 %v2238
        %2981 = vmatpush.bf16.msra.mxu0 %v2236
        %2982 = vmatmul.bf16.gmra.mxu0 %v811
        %v2983 = vpop.f32.mrf.mxu0
        %v2984 = vadd.f32 %v2970, %v2983
        %v2985 = vpop.f32.mrf.mxu0
        %v2986 = vadd.f32 %v2972, %v2985
        %2987 = vdwg.mxu0
        %2988 = vmatpush.bf16.msra.mxu0 %v2266
        %2989 = vmatpush.bf16.msra.mxu0 %v2264
        %2990 = vmatpush.bf16.msra.mxu0 %v2262
        %2991 = vmatpush.bf16.msra.mxu0 %v2260
        %2992 = vmatpush.bf16.msra.mxu0 %v2258
        %2993 = vmatpush.bf16.msra.mxu0 %v2256
        %2994 = vmatpush.bf16.msra.mxu0 %v2254
        %2995 = vmatpush.bf16.msra.mxu0 %v2252
        %2996 = vmatmul.bf16.gmra.mxu0 %v812
        %v2997 = vpop.f32.mrf.mxu0
        %v2998 = vadd.f32 %v2984, %v2997
        %v2999 = vpop.f32.mrf.mxu0
        %v3000 = vadd.f32 %v2986, %v2999
        %3001 = vdwg.mxu0
        %3002 = vmatpush.bf16.msra.mxu0 %v2282
        %3003 = vmatpush.bf16.msra.mxu0 %v2280
        %3004 = vmatpush.bf16.msra.mxu0 %v2278
        %3005 = vmatpush.bf16.msra.mxu0 %v2276
        %3006 = vmatpush.bf16.msra.mxu0 %v2274
        %3007 = vmatpush.bf16.msra.mxu0 %v2272
        %3008 = vmatpush.bf16.msra.mxu0 %v2270
        %3009 = vmatpush.bf16.msra.mxu0 %v2268
        %3010 = vmatmul.bf16.gmra.mxu0 %v813
        %v3011 = vpop.f32.mrf.mxu0
        %v3012 = vadd.f32 %v2998, %v3011
        %v3013 = vpop.f32.mrf.mxu0
        %v3014 = vadd.f32 %v3000, %v3013
        %3015 = vdwg.mxu0
        %3016 = vmatpush.bf16.msra.mxu0 %v2298
        %3017 = vmatpush.bf16.msra.mxu0 %v2296
        %3018 = vmatpush.bf16.msra.mxu0 %v2294
        %3019 = vmatpush.bf16.msra.mxu0 %v2292
        %3020 = vmatpush.bf16.msra.mxu0 %v2290
        %3021 = vmatpush.bf16.msra.mxu0 %v2288
        %3022 = vmatpush.bf16.msra.mxu0 %v2286
        %3023 = vmatpush.bf16.msra.mxu0 %v2284
        %3024 = vmatmul.bf16.gmra.mxu0 %v814
        %v3025 = vpop.f32.mrf.mxu0
        %v3026 = vadd.f32 %v3012, %v3025
        %v3027 = vpop.f32.mrf.mxu0
        %v3028 = vadd.f32 %v3014, %v3027
        %3029 = vdwg.mxu0
        %3030 = vmatpush.bf16.msra.mxu0 %v2314
        %3031 = vmatpush.bf16.msra.mxu0 %v2312
        %3032 = vmatpush.bf16.msra.mxu0 %v2310
        %3033 = vmatpush.bf16.msra.mxu0 %v2308
        %3034 = vmatpush.bf16.msra.mxu0 %v2306
        %3035 = vmatpush.bf16.msra.mxu0 %v2304
        %3036 = vmatpush.bf16.msra.mxu0 %v2302
        %3037 = vmatpush.bf16.msra.mxu0 %v2300
        %3038 = vmatmul.bf16.gmra.mxu0 %v815
        %v3039 = vpop.f32.mrf.mxu0
        %v3040 = vadd.f32 %v3026, %v3039
        %v3041 = vpop.f32.mrf.mxu0
        %v3042 = vadd.f32 %v3028, %v3041
        %3043 = vdwg.mxu0
        %3044 = vmatpush.bf16.msra.mxu0 %v2330
        %3045 = vmatpush.bf16.msra.mxu0 %v2328
        %3046 = vmatpush.bf16.msra.mxu0 %v2326
        %3047 = vmatpush.bf16.msra.mxu0 %v2324
        %3048 = vmatpush.bf16.msra.mxu0 %v2322
        %3049 = vmatpush.bf16.msra.mxu0 %v2320
        %3050 = vmatpush.bf16.msra.mxu0 %v2318
        %3051 = vmatpush.bf16.msra.mxu0 %v2316
        %3052 = vmatmul.bf16.gmra.mxu0 %v816
        %v3053 = vpop.f32.mrf.mxu0
        %v3054 = vadd.f32 %v3040, %v3053
        %v3055 = vpop.f32.mrf.mxu0
        %v3056 = vadd.f32 %v3042, %v3055
        %3057 = vdwg.mxu0
        %3058 = vmatpush.bf16.msra.mxu0 %v2346
        %3059 = vmatpush.bf16.msra.mxu0 %v2344
        %3060 = vmatpush.bf16.msra.mxu0 %v2342
        %3061 = vmatpush.bf16.msra.mxu0 %v2340
        %3062 = vmatpush.bf16.msra.mxu0 %v2338
        %3063 = vmatpush.bf16.msra.mxu0 %v2336
        %3064 = vmatpush.bf16.msra.mxu0 %v2334
        %3065 = vmatpush.bf16.msra.mxu0 %v2332
        %3066 = vmatmul.bf16.gmra.mxu0 %v817
        %v3067 = vpop.f32.mrf.mxu0
        %v3068 = vadd.f32 %v3054, %v3067
        %v3069 = vpop.f32.mrf.mxu0
        %v3070 = vadd.f32 %v3056, %v3069
        %3071 = vdwg.mxu0
        %3072 = vmatpush.bf16.msra.mxu0 %v2362
        %3073 = vmatpush.bf16.msra.mxu0 %v2360
        %3074 = vmatpush.bf16.msra.mxu0 %v2358
        %3075 = vmatpush.bf16.msra.mxu0 %v2356
        %3076 = vmatpush.bf16.msra.mxu0 %v2354
        %3077 = vmatpush.bf16.msra.mxu0 %v2352
        %3078 = vmatpush.bf16.msra.mxu0 %v2350
        %3079 = vmatpush.bf16.msra.mxu0 %v2348
        %3080 = vmatmul.bf16.gmra.mxu0 %v818
        %v3081 = vpop.f32.mrf.mxu0
        %v3082 = vadd.f32 %v3068, %v3081
        %v3083 = vpop.f32.mrf.mxu0
        %v3084 = vadd.f32 %v3070, %v3083
        %3085 = vdwg.mxu0
        %3086 = vmatpush.bf16.msra.mxu0 %v2378
        %3087 = vmatpush.bf16.msra.mxu0 %v2376
        %3088 = vmatpush.bf16.msra.mxu0 %v2374
        %3089 = vmatpush.bf16.msra.mxu0 %v2372
        %3090 = vmatpush.bf16.msra.mxu0 %v2370
        %3091 = vmatpush.bf16.msra.mxu0 %v2368
        %3092 = vmatpush.bf16.msra.mxu0 %v2366
        %3093 = vmatpush.bf16.msra.mxu0 %v2364
        %3094 = vmatmul.bf16.gmra.mxu0 %v819
        %v3095 = vpop.f32.mrf.mxu0
        %v3096 = vadd.f32 %v3082, %v3095
        %v3097 = vpop.f32.mrf.mxu0
        %v3098 = vadd.f32 %v3084, %v3097
        %3099 = vdwg.mxu0
        %3100 = vmatpush.bf16.msra.mxu0 %v2011
        %3101 = vmatpush.bf16.msra.mxu0 %v2009
        %3102 = vmatpush.bf16.msra.mxu0 %v2007
        %3103 = vmatpush.bf16.msra.mxu0 %v2005
        %3104 = vmatpush.bf16.msra.mxu0 %v2003
        %3105 = vmatpush.bf16.msra.mxu0 %v2001
        %3106 = vmatpush.bf16.msra.mxu0 %v1999
        %3107 = vmatpush.bf16.msra.mxu0 %v1997
        %3108 = vmatmul.bf16.gmra.mxu0 %v796
        %v3109 = vpop.f32.mrf.mxu0
        %v3110 = vadd.f32 0.0, %v3109
        %v3111 = vpop.f32.mrf.mxu0
        %v3112 = vadd.f32 0.0, %v3111
        %3113 = vdwg.mxu0
        %3114 = vmatpush.bf16.msra.mxu0 %v2027
        %3115 = vmatpush.bf16.msra.mxu0 %v2025
        %3116 = vmatpush.bf16.msra.mxu0 %v2023
        %3117 = vmatpush.bf16.msra.mxu0 %v2021
        %3118 = vmatpush.bf16.msra.mxu0 %v2019
        %3119 = vmatpush.bf16.msra.mxu0 %v2017
        %3120 = vmatpush.bf16.msra.mxu0 %v2015
        %3121 = vmatpush.bf16.msra.mxu0 %v2013
        %3122 = vmatmul.bf16.gmra.mxu0 %v797
        %v3123 = vpop.f32.mrf.mxu0
        %v3124 = vadd.f32 %v3110, %v3123
        %v3125 = vpop.f32.mrf.mxu0
        %v3126 = vadd.f32 %v3112, %v3125
        %3127 = vdwg.mxu0
        %3128 = vmatpush.bf16.msra.mxu0 %v2043
        %3129 = vmatpush.bf16.msra.mxu0 %v2041
        %3130 = vmatpush.bf16.msra.mxu0 %v2039
        %3131 = vmatpush.bf16.msra.mxu0 %v2037
        %3132 = vmatpush.bf16.msra.mxu0 %v2035
        %3133 = vmatpush.bf16.msra.mxu0 %v2033
        %3134 = vmatpush.bf16.msra.mxu0 %v2031
        %3135 = vmatpush.bf16.msra.mxu0 %v2029
        %3136 = vmatmul.bf16.gmra.mxu0 %v798
        %v3137 = vpop.f32.mrf.mxu0
        %v3138 = vadd.f32 %v3124, %v3137
        %v3139 = vpop.f32.mrf.mxu0
        %v3140 = vadd.f32 %v3126, %v3139
        %3141 = vdwg.mxu0
        %3142 = vmatpush.bf16.msra.mxu0 %v2059
        %3143 = vmatpush.bf16.msra.mxu0 %v2057
        %3144 = vmatpush.bf16.msra.mxu0 %v2055
        %3145 = vmatpush.bf16.msra.mxu0 %v2053
        %3146 = vmatpush.bf16.msra.mxu0 %v2051
        %3147 = vmatpush.bf16.msra.mxu0 %v2049
        %3148 = vmatpush.bf16.msra.mxu0 %v2047
        %3149 = vmatpush.bf16.msra.mxu0 %v2045
        %3150 = vmatmul.bf16.gmra.mxu0 %v799
        %v3151 = vpop.f32.mrf.mxu0
        %v3152 = vadd.f32 %v3138, %v3151
        %v3153 = vpop.f32.mrf.mxu0
        %v3154 = vadd.f32 %v3140, %v3153
        %3155 = vdwg.mxu0
        %3156 = vmatpush.bf16.msra.mxu0 %v2075
        %3157 = vmatpush.bf16.msra.mxu0 %v2073
        %3158 = vmatpush.bf16.msra.mxu0 %v2071
        %3159 = vmatpush.bf16.msra.mxu0 %v2069
        %3160 = vmatpush.bf16.msra.mxu0 %v2067
        %3161 = vmatpush.bf16.msra.mxu0 %v2065
        %3162 = vmatpush.bf16.msra.mxu0 %v2063
        %3163 = vmatpush.bf16.msra.mxu0 %v2061
        %3164 = vmatmul.bf16.gmra.mxu0 %v800
        %v3165 = vpop.f32.mrf.mxu0
        %v3166 = vadd.f32 %v3152, %v3165
        %v3167 = vpop.f32.mrf.mxu0
        %v3168 = vadd.f32 %v3154, %v3167
        %3169 = vdwg.mxu0
        %3170 = vmatpush.bf16.msra.mxu0 %v2091
        %3171 = vmatpush.bf16.msra.mxu0 %v2089
        %3172 = vmatpush.bf16.msra.mxu0 %v2087
        %3173 = vmatpush.bf16.msra.mxu0 %v2085
        %3174 = vmatpush.bf16.msra.mxu0 %v2083
        %3175 = vmatpush.bf16.msra.mxu0 %v2081
        %3176 = vmatpush.bf16.msra.mxu0 %v2079
        %3177 = vmatpush.bf16.msra.mxu0 %v2077
        %3178 = vmatmul.bf16.gmra.mxu0 %v801
        %v3179 = vpop.f32.mrf.mxu0
        %v3180 = vadd.f32 %v3166, %v3179
        %v3181 = vpop.f32.mrf.mxu0
        %v3182 = vadd.f32 %v3168, %v3181
        %3183 = vdwg.mxu0
        %3184 = vmatpush.bf16.msra.mxu0 %v2107
        %3185 = vmatpush.bf16.msra.mxu0 %v2105
        %3186 = vmatpush.bf16.msra.mxu0 %v2103
        %3187 = vmatpush.bf16.msra.mxu0 %v2101
        %3188 = vmatpush.bf16.msra.mxu0 %v2099
        %3189 = vmatpush.bf16.msra.mxu0 %v2097
        %3190 = vmatpush.bf16.msra.mxu0 %v2095
        %3191 = vmatpush.bf16.msra.mxu0 %v2093
        %3192 = vmatmul.bf16.gmra.mxu0 %v802
        %v3193 = vpop.f32.mrf.mxu0
        %v3194 = vadd.f32 %v3180, %v3193
        %v3195 = vpop.f32.mrf.mxu0
        %v3196 = vadd.f32 %v3182, %v3195
        %3197 = vdwg.mxu0
        %3198 = vmatpush.bf16.msra.mxu0 %v2123
        %3199 = vmatpush.bf16.msra.mxu0 %v2121
        %3200 = vmatpush.bf16.msra.mxu0 %v2119
        %3201 = vmatpush.bf16.msra.mxu0 %v2117
        %3202 = vmatpush.bf16.msra.mxu0 %v2115
        %3203 = vmatpush.bf16.msra.mxu0 %v2113
        %3204 = vmatpush.bf16.msra.mxu0 %v2111
        %3205 = vmatpush.bf16.msra.mxu0 %v2109
        %3206 = vmatmul.bf16.gmra.mxu0 %v803
        %v3207 = vpop.f32.mrf.mxu0
        %v3208 = vadd.f32 %v3194, %v3207
        %v3209 = vpop.f32.mrf.mxu0
        %v3210 = vadd.f32 %v3196, %v3209
        %3211 = vdwg.mxu0
        %3212 = vmatpush.bf16.msra.mxu0 %v2139
        %3213 = vmatpush.bf16.msra.mxu0 %v2137
        %3214 = vmatpush.bf16.msra.mxu0 %v2135
        %3215 = vmatpush.bf16.msra.mxu0 %v2133
        %3216 = vmatpush.bf16.msra.mxu0 %v2131
        %3217 = vmatpush.bf16.msra.mxu0 %v2129
        %3218 = vmatpush.bf16.msra.mxu0 %v2127
        %3219 = vmatpush.bf16.msra.mxu0 %v2125
        %3220 = vmatmul.bf16.gmra.mxu0 %v804
        %v3221 = vpop.f32.mrf.mxu0
        %v3222 = vadd.f32 %v3208, %v3221
        %v3223 = vpop.f32.mrf.mxu0
        %v3224 = vadd.f32 %v3210, %v3223
        %3225 = vdwg.mxu0
        %3226 = vmatpush.bf16.msra.mxu0 %v2155
        %3227 = vmatpush.bf16.msra.mxu0 %v2153
        %3228 = vmatpush.bf16.msra.mxu0 %v2151
        %3229 = vmatpush.bf16.msra.mxu0 %v2149
        %3230 = vmatpush.bf16.msra.mxu0 %v2147
        %3231 = vmatpush.bf16.msra.mxu0 %v2145
        %3232 = vmatpush.bf16.msra.mxu0 %v2143
        %3233 = vmatpush.bf16.msra.mxu0 %v2141
        %3234 = vmatmul.bf16.gmra.mxu0 %v805
        %v3235 = vpop.f32.mrf.mxu0
        %v3236 = vadd.f32 %v3222, %v3235
        %v3237 = vpop.f32.mrf.mxu0
        %v3238 = vadd.f32 %v3224, %v3237
        %3239 = vdwg.mxu0
        %3240 = vmatpush.bf16.msra.mxu0 %v2171
        %3241 = vmatpush.bf16.msra.mxu0 %v2169
        %3242 = vmatpush.bf16.msra.mxu0 %v2167
        %3243 = vmatpush.bf16.msra.mxu0 %v2165
        %3244 = vmatpush.bf16.msra.mxu0 %v2163
        %3245 = vmatpush.bf16.msra.mxu0 %v2161
        %3246 = vmatpush.bf16.msra.mxu0 %v2159
        %3247 = vmatpush.bf16.msra.mxu0 %v2157
        %3248 = vmatmul.bf16.gmra.mxu0 %v806
        %v3249 = vpop.f32.mrf.mxu0
        %v3250 = vadd.f32 %v3236, %v3249
        %v3251 = vpop.f32.mrf.mxu0
        %v3252 = vadd.f32 %v3238, %v3251
        %3253 = vdwg.mxu0
        %3254 = vmatpush.bf16.msra.mxu0 %v2187
        %3255 = vmatpush.bf16.msra.mxu0 %v2185
        %3256 = vmatpush.bf16.msra.mxu0 %v2183
        %3257 = vmatpush.bf16.msra.mxu0 %v2181
        %3258 = vmatpush.bf16.msra.mxu0 %v2179
        %3259 = vmatpush.bf16.msra.mxu0 %v2177
        %3260 = vmatpush.bf16.msra.mxu0 %v2175
        %3261 = vmatpush.bf16.msra.mxu0 %v2173
        %3262 = vmatmul.bf16.gmra.mxu0 %v807
        %v3263 = vpop.f32.mrf.mxu0
        %v3264 = vadd.f32 %v3250, %v3263
        %v3265 = vpop.f32.mrf.mxu0
        %v3266 = vadd.f32 %v3252, %v3265
        %3267 = vdwg.mxu0
        %3268 = vmatpush.bf16.msra.mxu0 %v2203
        %3269 = vmatpush.bf16.msra.mxu0 %v2201
        %3270 = vmatpush.bf16.msra.mxu0 %v2199
        %3271 = vmatpush.bf16.msra.mxu0 %v2197
        %3272 = vmatpush.bf16.msra.mxu0 %v2195
        %3273 = vmatpush.bf16.msra.mxu0 %v2193
        %3274 = vmatpush.bf16.msra.mxu0 %v2191
        %3275 = vmatpush.bf16.msra.mxu0 %v2189
        %3276 = vmatmul.bf16.gmra.mxu0 %v808
        %v3277 = vpop.f32.mrf.mxu0
        %v3278 = vadd.f32 %v3264, %v3277
        %v3279 = vpop.f32.mrf.mxu0
        %v3280 = vadd.f32 %v3266, %v3279
        %3281 = vdwg.mxu0
        %3282 = vmatpush.bf16.msra.mxu0 %v2219
        %3283 = vmatpush.bf16.msra.mxu0 %v2217
        %3284 = vmatpush.bf16.msra.mxu0 %v2215
        %3285 = vmatpush.bf16.msra.mxu0 %v2213
        %3286 = vmatpush.bf16.msra.mxu0 %v2211
        %3287 = vmatpush.bf16.msra.mxu0 %v2209
        %3288 = vmatpush.bf16.msra.mxu0 %v2207
        %3289 = vmatpush.bf16.msra.mxu0 %v2205
        %3290 = vmatmul.bf16.gmra.mxu0 %v809
        %v3291 = vpop.f32.mrf.mxu0
        %v3292 = vadd.f32 %v3278, %v3291
        %v3293 = vpop.f32.mrf.mxu0
        %v3294 = vadd.f32 %v3280, %v3293
        %3295 = vdwg.mxu0
        %3296 = vmatpush.bf16.msra.mxu0 %v2235
        %3297 = vmatpush.bf16.msra.mxu0 %v2233
        %3298 = vmatpush.bf16.msra.mxu0 %v2231
        %3299 = vmatpush.bf16.msra.mxu0 %v2229
        %3300 = vmatpush.bf16.msra.mxu0 %v2227
        %3301 = vmatpush.bf16.msra.mxu0 %v2225
        %3302 = vmatpush.bf16.msra.mxu0 %v2223
        %3303 = vmatpush.bf16.msra.mxu0 %v2221
        %3304 = vmatmul.bf16.gmra.mxu0 %v810
        %v3305 = vpop.f32.mrf.mxu0
        %v3306 = vadd.f32 %v3292, %v3305
        %v3307 = vpop.f32.mrf.mxu0
        %v3308 = vadd.f32 %v3294, %v3307
        %3309 = vdwg.mxu0
        %3310 = vmatpush.bf16.msra.mxu0 %v2251
        %3311 = vmatpush.bf16.msra.mxu0 %v2249
        %3312 = vmatpush.bf16.msra.mxu0 %v2247
        %3313 = vmatpush.bf16.msra.mxu0 %v2245
        %3314 = vmatpush.bf16.msra.mxu0 %v2243
        %3315 = vmatpush.bf16.msra.mxu0 %v2241
        %3316 = vmatpush.bf16.msra.mxu0 %v2239
        %3317 = vmatpush.bf16.msra.mxu0 %v2237
        %3318 = vmatmul.bf16.gmra.mxu0 %v811
        %v3319 = vpop.f32.mrf.mxu0
        %v3320 = vadd.f32 %v3306, %v3319
        %v3321 = vpop.f32.mrf.mxu0
        %v3322 = vadd.f32 %v3308, %v3321
        %3323 = vdwg.mxu0
        %3324 = vmatpush.bf16.msra.mxu0 %v2267
        %3325 = vmatpush.bf16.msra.mxu0 %v2265
        %3326 = vmatpush.bf16.msra.mxu0 %v2263
        %3327 = vmatpush.bf16.msra.mxu0 %v2261
        %3328 = vmatpush.bf16.msra.mxu0 %v2259
        %3329 = vmatpush.bf16.msra.mxu0 %v2257
        %3330 = vmatpush.bf16.msra.mxu0 %v2255
        %3331 = vmatpush.bf16.msra.mxu0 %v2253
        %3332 = vmatmul.bf16.gmra.mxu0 %v812
        %v3333 = vpop.f32.mrf.mxu0
        %v3334 = vadd.f32 %v3320, %v3333
        %v3335 = vpop.f32.mrf.mxu0
        %v3336 = vadd.f32 %v3322, %v3335
        %3337 = vdwg.mxu0
        %3338 = vmatpush.bf16.msra.mxu0 %v2283
        %3339 = vmatpush.bf16.msra.mxu0 %v2281
        %3340 = vmatpush.bf16.msra.mxu0 %v2279
        %3341 = vmatpush.bf16.msra.mxu0 %v2277
        %3342 = vmatpush.bf16.msra.mxu0 %v2275
        %3343 = vmatpush.bf16.msra.mxu0 %v2273
        %3344 = vmatpush.bf16.msra.mxu0 %v2271
        %3345 = vmatpush.bf16.msra.mxu0 %v2269
        %3346 = vmatmul.bf16.gmra.mxu0 %v813
        %v3347 = vpop.f32.mrf.mxu0
        %v3348 = vadd.f32 %v3334, %v3347
        %v3349 = vpop.f32.mrf.mxu0
        %v3350 = vadd.f32 %v3336, %v3349
        %3351 = vdwg.mxu0
        %3352 = vmatpush.bf16.msra.mxu0 %v2299
        %3353 = vmatpush.bf16.msra.mxu0 %v2297
        %3354 = vmatpush.bf16.msra.mxu0 %v2295
        %3355 = vmatpush.bf16.msra.mxu0 %v2293
        %3356 = vmatpush.bf16.msra.mxu0 %v2291
        %3357 = vmatpush.bf16.msra.mxu0 %v2289
        %3358 = vmatpush.bf16.msra.mxu0 %v2287
        %3359 = vmatpush.bf16.msra.mxu0 %v2285
        %3360 = vmatmul.bf16.gmra.mxu0 %v814
        %v3361 = vpop.f32.mrf.mxu0
        %v3362 = vadd.f32 %v3348, %v3361
        %v3363 = vpop.f32.mrf.mxu0
        %v3364 = vadd.f32 %v3350, %v3363
        %3365 = vdwg.mxu0
        %3366 = vmatpush.bf16.msra.mxu0 %v2315
        %3367 = vmatpush.bf16.msra.mxu0 %v2313
        %3368 = vmatpush.bf16.msra.mxu0 %v2311
        %3369 = vmatpush.bf16.msra.mxu0 %v2309
        %3370 = vmatpush.bf16.msra.mxu0 %v2307
        %3371 = vmatpush.bf16.msra.mxu0 %v2305
        %3372 = vmatpush.bf16.msra.mxu0 %v2303
        %3373 = vmatpush.bf16.msra.mxu0 %v2301
        %3374 = vmatmul.bf16.gmra.mxu0 %v815
        %v3375 = vpop.f32.mrf.mxu0
        %v3376 = vadd.f32 %v3362, %v3375
        %v3377 = vpop.f32.mrf.mxu0
        %v3378 = vadd.f32 %v3364, %v3377
        %3379 = vdwg.mxu0
        %3380 = vmatpush.bf16.msra.mxu0 %v2331
        %3381 = vmatpush.bf16.msra.mxu0 %v2329
        %3382 = vmatpush.bf16.msra.mxu0 %v2327
        %3383 = vmatpush.bf16.msra.mxu0 %v2325
        %3384 = vmatpush.bf16.msra.mxu0 %v2323
        %3385 = vmatpush.bf16.msra.mxu0 %v2321
        %3386 = vmatpush.bf16.msra.mxu0 %v2319
        %3387 = vmatpush.bf16.msra.mxu0 %v2317
        %3388 = vmatmul.bf16.gmra.mxu0 %v816
        %v3389 = vpop.f32.mrf.mxu0
        %v3390 = vadd.f32 %v3376, %v3389
        %v3391 = vpop.f32.mrf.mxu0
        %v3392 = vadd.f32 %v3378, %v3391
        %3393 = vdwg.mxu0
        %3394 = vmatpush.bf16.msra.mxu0 %v2347
        %3395 = vmatpush.bf16.msra.mxu0 %v2345
        %3396 = vmatpush.bf16.msra.mxu0 %v2343
        %3397 = vmatpush.bf16.msra.mxu0 %v2341
        %3398 = vmatpush.bf16.msra.mxu0 %v2339
        %3399 = vmatpush.bf16.msra.mxu0 %v2337
        %3400 = vmatpush.bf16.msra.mxu0 %v2335
        %3401 = vmatpush.bf16.msra.mxu0 %v2333
        %3402 = vmatmul.bf16.gmra.mxu0 %v817
        %v3403 = vpop.f32.mrf.mxu0
        %v3404 = vadd.f32 %v3390, %v3403
        %v3405 = vpop.f32.mrf.mxu0
        %v3406 = vadd.f32 %v3392, %v3405
        %3407 = vdwg.mxu0
        %3408 = vmatpush.bf16.msra.mxu0 %v2363
        %3409 = vmatpush.bf16.msra.mxu0 %v2361
        %3410 = vmatpush.bf16.msra.mxu0 %v2359
        %3411 = vmatpush.bf16.msra.mxu0 %v2357
        %3412 = vmatpush.bf16.msra.mxu0 %v2355
        %3413 = vmatpush.bf16.msra.mxu0 %v2353
        %3414 = vmatpush.bf16.msra.mxu0 %v2351
        %3415 = vmatpush.bf16.msra.mxu0 %v2349
        %3416 = vmatmul.bf16.gmra.mxu0 %v818
        %v3417 = vpop.f32.mrf.mxu0
        %v3418 = vadd.f32 %v3404, %v3417
        %v3419 = vpop.f32.mrf.mxu0
        %v3420 = vadd.f32 %v3406, %v3419
        %3421 = vdwg.mxu0
        %3422 = vmatpush.bf16.msra.mxu0 %v2379
        %3423 = vmatpush.bf16.msra.mxu0 %v2377
        %3424 = vmatpush.bf16.msra.mxu0 %v2375
        %3425 = vmatpush.bf16.msra.mxu0 %v2373
        %3426 = vmatpush.bf16.msra.mxu0 %v2371
        %3427 = vmatpush.bf16.msra.mxu0 %v2369
        %3428 = vmatpush.bf16.msra.mxu0 %v2367
        %3429 = vmatpush.bf16.msra.mxu0 %v2365
        %3430 = vmatmul.bf16.gmra.mxu0 %v819
        %v3431 = vpop.f32.mrf.mxu0
        %v3432 = vadd.f32 %v3418, %v3431
        %v3433 = vpop.f32.mrf.mxu0
        %v3434 = vadd.f32 %v3420, %v3433
        %3435 = vdwg.mxu0
        %v3436 = vadd.f32 %v336, %v3096
        %v3437 = vadd.f32 %v337, %v3432
        %v3438 = vadd.f32 %v338, %v3098
        %v3439 = vadd.f32 %v339, %v3434
        %3440 = vst [vmem:[%s291] sm:$0xff] %v3436
        %3441 = vst [vmem:[%s291 + $0x8] sm:$0xff] %v3437
        %3442 = vst [vmem:[%s291 + $0x10] sm:$0xff] %v3438
        %3443 = vst [vmem:[%s291 + $0x18] sm:$0xff] %v3439
        // Predicated region
        $region49: #{tpu_custom_call.1} parent=31 // pred_check
          %p3444 = pneg %p304
        $region50: #{tpu_custom_call.1} parent=31 // pred_check_branch
          %3446 = sbr.rel (%p3444) target = $region52
        $region51: #{tpu_custom_call.1} parent=31 // pred_region
          %v3447 = vld [vmem:[%s291] sm:$0xff]
          %v3448 = vld [vmem:[%s291 + $0x8] sm:$0xff]
          %v3449 = vld [vmem:[%s291 + $0x10] sm:$0xff]
          %v3450 = vld [vmem:[%s291 + $0x18] sm:$0xff]
          %v3451 = vld [vmem:[%s263] sm:$0x3]
          %v3453 = vperm.slane %v3451, 0
          %v3454 = vperm.slane %v3451, 1
          %v3457 = vadd.f32 %v3447, %v3453
          %v3458 = vadd.f32 %v3448, %v3454
          %v3459 = vadd.f32 %v3449, %v3453
          %v3460 = vadd.f32 %v3450, %v3454
          %3461 = vst [vmem:[%s291] sm:$0xff] %v3457
          %3462 = vst [vmem:[%s291 + $0x8] sm:$0xff] %v3458
          %3463 = vst [vmem:[%s291 + $0x10] sm:$0xff] %v3459
          %3464 = vst [vmem:[%s291 + $0x18] sm:$0xff] %v3460
          %v3465 = vmax.f32 %v3457, %v3459
          %v3466 = vmax.f32 %v3458, %v3460
          %3467 = vst [vmem:[%s298] sm:$0xff] %v3465
          %3468 = vst [vmem:[%s298 + $0x8] sm:$0xff] %v3466
        $region52: #{tpu_custom_call.1} parent=31 // pred_fallthru
          _
        %s3469 = sand.u32 %s121, 1
        %s3470 = scalar_lea.sflag [#allocation4], %s3469
        %s3471 = sand.u32 %s121, 1
        %s3472 = smul.addr %s3471, 32
        %s3473 = scalar_lea.vmem [#allocation8], %s3472
        %s3474 = sand.u32 %s147, 1
        %s3475 = scalar_lea.sflag [#allocation10], %s3474
        %s3476 = sand.u32 %s147, 1
        %s3477 = smul.addr %s3476, 16
        %s3478 = scalar_lea.vmem [#allocation9], %s3477
        // Predicated region
        $region53: #{tpu_custom_call.1} parent=31 // pred_check
          %p3479 = pneg %p131
        $region54: #{tpu_custom_call.1} parent=31 // pred_check_branch
          %3481 = sbr.rel (%p3479) target = $region56
        $region55: #{tpu_custom_call.1} parent=31 // pred_region
          %s3482 = smul.u32 2, %s30
          %3484 = vsyncadd %s3470, 0
          %s3485 = smul.addr %s3482, 8
          %s3486 = scalar_lea.hbm %s3, %s3485
          %s3487 = sshll.u32 %s3473, 4
          %s3488 = int_to_ptr.vmem [resolvable:$true] %s3487
          %s3489 = sshll.u32 %s3486, 4
          %s3490 = int_to_ptr.hbm [resolvable:$true] %s3489
          %3495 = dma.vmem_to_hbm [thread:$0]  %s3488, 512, %s3490, %s3470, 256, 512, 16
        $region56: #{tpu_custom_call.1} parent=31 // pred_fallthru
          _
        // Predicated region
        $region57: #{tpu_custom_call.1} parent=31 // pred_check
          %p3496 = pneg %p157
        $region58: #{tpu_custom_call.1} parent=31 // pred_check_branch
          %3498 = sbr.rel (%p3496) target = $region60
        $region59: #{tpu_custom_call.1} parent=31 // pred_region
          %s3499 = smul.u32 2, %s30
          %3501 = vsyncadd %s3475, 0
          %s3502 = smul.addr %s3499, 8
          %s3503 = scalar_lea.hbm %s4, %s3502
          %s3505 = sshll.u32 %s3478, 4
          %s3506 = int_to_ptr.vmem [resolvable:$true] %s3505
          %s3507 = sshll.u32 %s3503, 4
          %s3508 = int_to_ptr.hbm [resolvable:$true] %s3507
          %3510 = dma.vmem_to_hbm [thread:$0]  %s3506, 256, %s3508, %s3475
        $region60: #{tpu_custom_call.1} parent=31 // pred_fallthru
          _
      $region32: #{tpu_custom_call.1} parent=5 // pred_fallthru
        _
      %p3511 = scmp.le.s32.totalorder 2, %s21
      // Predicated region
      $region61: #{tpu_custom_call.1} parent=5 // pred_check
        %p3512 = pneg %p3511
      $region62: #{tpu_custom_call.1} parent=5 // pred_check_branch
        %3514 = sbr.rel (%p3512) target = $region64
      $region63: #{tpu_custom_call.1} parent=5 // pred_region
        %s3515 = ssub.s32 %s21, 2
        // Predicated region
        $region65: #{tpu_custom_call.1} parent=63 // pred_check
          %p3516 = pneg %p137
        $region66: #{tpu_custom_call.1} parent=63 // pred_check_branch
          %3518 = sbr.rel (%p3516) target = $region68
        $region67: #{tpu_custom_call.1} parent=63 // pred_region
          %s3519 = sand.u32 %s122, 1
          %s3520 = scalar_lea.sflag [#allocation4], %s3519
          %s3521 = sand.u32 %s122, 1
          %s3522 = smul.addr %s3521, 32
          %s3523 = scalar_lea.vmem [#allocation8], %s3522
          %3525 = dma.done %s3520, 512
        $region68: #{tpu_custom_call.1} parent=63 // pred_fallthru
          _
        // Predicated region
        $region69: #{tpu_custom_call.1} parent=63 // pred_check
          %p3526 = pneg %p163
        $region70: #{tpu_custom_call.1} parent=63 // pred_check_branch
          %3528 = sbr.rel (%p3526) target = $region72
        $region71: #{tpu_custom_call.1} parent=63 // pred_region
          %s3529 = sand.u32 %s148, 1
          %s3530 = scalar_lea.sflag [#allocation10], %s3529
          %s3531 = sand.u32 %s148, 1
          %s3532 = smul.addr %s3531, 16
          %s3533 = scalar_lea.vmem [#allocation9], %s3532
          %3535 = dma.done %s3530, 256
        $region72: #{tpu_custom_call.1} parent=63 // pred_fallthru
          _
      $region64: #{tpu_custom_call.1} parent=5 // pred_fallthru
        _
    $region6: #{tpu_custom_call.1} parent=1 // loop_footer
      %s25 = sadd.s32 1, %s21
    $region7: #{tpu_custom_call.1} parent=1 // loop_footer_branch
      %20 = sbr.rel target = $region3
    $region8: #{tpu_custom_call.1} parent=1 // loop_exit
      _
    %3536 = vsyncpa [#allocation3], 1
    %s3537 = scalar_lea.sflag [#allocation3], 1
    %3538 = vsyncpa %s3537, 1
    %3539 = vsyncpa [#allocation6], 1
    %s3540 = scalar_lea.sflag [#allocation6], 1
    %3541 = vsyncpa %s3540, 1
    %3542 = vsyncpa [#allocation4], 1
    %s3543 = scalar_lea.sflag [#allocation4], 1
    %3544 = vsyncpa %s3543, 1
    %3545 = vsyncpa [#allocation10], 1
    %s3546 = scalar_lea.sflag [#allocation10], 1
    %3547 = vsyncpa %s3546, 1

</llo_original>
